<compile_context>
chip_gen: v5e
topology: v5e:2x2
jax: 0.10.0
libtpu: 0.0.40
codegen_flags: <defaults>
</compile_context>

<pallas_src>
import functools

import jax
import jax.numpy as jnp
from jax.experimental import pallas as pl
from jax.experimental.pallas import tpu as pltpu

EPS = 1e-5  # nn.LayerNorm default eps


def _round_up(v, m):
    return ((v + m - 1) // m) * m


# ---------------------------------------------------------------------------
# Fused BasicBlock kernel:
#   concat(x, heatmap) -> conv3x3 -> LayerNorm([C,H,W]) -> ReLU
#                      -> conv3x3 -> LayerNorm([C,H,W]) -> ReLU
#   [-> optional fused final 1x1 conv + bias epilogue]
# All activations handled channel-major (C, H*W_padded): the lane axis is the
# large spatial axis -> lane-dense MXU operands and lane-dense stores.
# ---------------------------------------------------------------------------
def _basic_block_kernel(x_ref, hm_ref, w1x_ref, w1h_ref, w2_ref, *rest,
                        H, W, S, has_final):
    if has_final:
        wf_ref, bf_ref, o_ref = rest
    else:
        (o_ref,) = rest
    Sp = x_ref.shape[-1]          # lane-padded flat spatial size (multiple of 128)

    # ---- boundary masks: built once, reused by both convs and all taps -------
    q = jax.lax.broadcasted_iota(jnp.int32, (1, Sp), 1)
    row = jnp.floor((q.astype(jnp.float32) + 0.5) * (1.0 / W)).astype(jnp.int32)
    col = q - row * W
    valid = q < S                 # padded lanes are excluded from every tap
    masks = {}
    for dh in (-1, 0, 1):
        for dw in (-1, 0, 1):
            m = ((row + dh >= 0) & (row + dh < H) &
                 (col + dw >= 0) & (col + dw < W) & valid)
            masks[(dh, dw)] = m.astype(jnp.float32)

    def tap(a, dh, dw):
        """t[:, i*W+j] = a[:, (i+dh)*W+(j+dw)] where in-bounds, else 0."""
        d = dh * W + dw
        t = a if d == 0 else pltpu.roll(a, shift=(-d) % Sp, axis=1)
        return t * masks[(dh, dw)]

    def conv3x3(parts, w_refs):
        # 9 accumulated per-tap matmuls; no im2col scratch is materialized.
        acc = None
        for kh in range(3):
            for kw in range(3):
                t = kh * 3 + kw
                for a, w_ref in zip(parts, w_refs):
                    c = jax.lax.dot_general(
                        w_ref[t], tap(a, kh - 1, kw - 1),
                        (((1,), (0,)), ((), ())),
                        preferred_element_type=jnp.float32)
                    acc = c if acc is None else acc + c
        return acc

    def ln_relu(y):
        # LayerNorm over all (C, H, W) elements of this sample.  Conv outputs at
        # padded lanes are exactly zero (every tap is masked), so one-pass stats
        # over the full (C, Sp) block are unbiased; divide by the true count.
        n = y.shape[0] * S
        s = jnp.sum(y)
        ss = jnp.sum(y * y)
        mean = s / n
        var = ss / n - mean * mean
        inv = jax.lax.rsqrt(var + EPS)
        return jnp.maximum((y - mean) * inv, 0.0)

    x = x_ref[0].astype(jnp.float32)                    # (Cx, Sp)
    hm = hm_ref[0].astype(jnp.float32)                  # (K,  Sp)
    h = ln_relu(conv3x3([x, hm], [w1x_ref, w1h_ref]))   # (Cmid, Sp), stays on chip
    h = ln_relu(conv3x3([h], [w2_ref]))                 # (Cmid, Sp)
    if has_final:
        y = jax.lax.dot_general(wf_ref[...], h, (((1,), (0,)), ((), ())),
                                preferred_element_type=jnp.float32)
        o_ref[0] = (y + bf_ref[...]).astype(o_ref.dtype)
    else:
        o_ref[0] = h.astype(o_ref.dtype)


def _pack_taps(w_pt):
    """(Cout, Cin, 3, 3) -> (9, Cout, Cin): tap-major per-tap weight slabs."""
    cout, cin = w_pt.shape[0], w_pt.shape[1]
    return jnp.transpose(w_pt, (2, 3, 0, 1)).reshape(9, cout, cin).astype(jnp.float32)


def basic_block(x_nchw, hm_nchw, w1_pt, w2_pt, out_hw,
                final_w=None, final_b=None):
    """BasicBlock.forward with the preceding channel-concat (and, for the last
    stage, the following 1x1 conv) fused into one pallas_call per batch sample."""
    N, Cx = x_nchw.shape[:2]
    K = hm_nchw.shape[1]
    H, W = out_hw
    S = H * W
    Sp = _round_up(S, 128)        # lane-dense spatial axis for all stages
    Cmid = w1_pt.shape[0]

    # Bilinear upsample is per-channel, so upsampling x and heatmap separately
    # is numerically identical to upsampling their concatenation — the
    # concatenated tensor never exists in HBM.
    x_up = jax.image.resize(x_nchw, (N, Cx, H, W), method="bilinear")
    hm_up = jax.image.resize(hm_nchw, (N, K, H, W), method="bilinear")

    def flat_pad(a, c):
        a = a.reshape(N, c, S)    # NCHW -> (N, C, H*W): pure reshape
        if Sp != S:
            a = jnp.pad(a, ((0, 0), (0, 0), (0, Sp - S)))
        return a

    x_flat = flat_pad(x_up, Cx)
    hm_flat = flat_pad(hm_up, K)

    # Split conv1 weights into the x-channel part and the heatmap-channel part
    # (concat order in the reference is cat(x, heatmap) along channels).
    w1x = _pack_taps(w1_pt[:, :Cx])     # (9, Cmid, Cx)
    w1h = _pack_taps(w1_pt[:, Cx:])     # (9, Cmid, K)
    w2 = _pack_taps(w2_pt)              # (9, Cmid, Cmid)

    has_final = final_w is not None
    Cout = final_w.shape[0] if has_final else Cmid

    in_specs = [
        pl.BlockSpec((1, Cx, Sp), lambda n: (n, 0, 0)),
        pl.BlockSpec((1, K, Sp), lambda n: (n, 0, 0)),
        pl.BlockSpec((9, Cmid, Cx), lambda n: (0, 0, 0)),
        pl.BlockSpec((9, Cmid, K), lambda n: (0, 0, 0)),
        pl.BlockSpec((9, Cmid, Cmid), lambda n: (0, 0, 0)),
    ]
    args = [x_flat, hm_flat, w1x, w1h, w2]
    if has_final:
        wf = final_w.reshape(Cout, Cmid).astype(jnp.float32)
        bf = final_b.reshape(Cout, 1).astype(jnp.float32)
        in_specs += [pl.BlockSpec((Cout, Cmid), lambda n: (0, 0)),
                     pl.BlockSpec((Cout, 1), lambda n: (0, 0))]
        args += [wf, bf]

    out = pl.pallas_call(
        functools.partial(_basic_block_kernel, H=H, W=W, S=S,
                          has_final=has_final),
        out_shape=jax.ShapeDtypeStruct((N, Cout, Sp), x_nchw.dtype),
        grid=(N,),
        in_specs=in_specs,
        out_specs=pl.BlockSpec((1, Cout, Sp), lambda n: (n, 0, 0)),
        compiler_params=pltpu.CompilerParams(
            dimension_semantics=("parallel",)),
    )(*args)
    return out[:, :, :S].reshape(N, Cout, H, W)


# ---------------------------------------------------------------------------
# Decoder.forward
# ---------------------------------------------------------------------------
def decoder_forward(x, heatmap, params):
    """Mirrors Decoder.forward: per-stage cat with heatmap[i] + BasicBlock; the
    final 1x1 conv is fused into the last stage's kernel."""
    h = x[0]
    for i in range(5):
        last = i == 4
        h = basic_block(
            h, heatmap[i], params["w1"][i], params["w2"][i], params["sizes"][i],
            final_w=params["wf"] if last else None,
            final_b=params["bf"] if last else None)
    return h


# ---------------------------------------------------------------------------
# Pure-JAX reference (for verification)
# ---------------------------------------------------------------------------
def _ref_decoder(x, heatmap, params):
    def cbr(y, w):
        y = jax.lax.conv_general_dilated(
            y, w, (1, 1), ((1, 1), (1, 1)),
            dimension_numbers=("NCHW", "OIHW", "NCHW"))
        mean = jnp.mean(y, axis=(1, 2, 3), keepdims=True)
        var = jnp.mean((y - mean) ** 2, axis=(1, 2, 3), keepdims=True)
        return jnp.maximum((y - mean) * jax.lax.rsqrt(var + EPS), 0.0)

    h = jnp.concatenate([x[0], heatmap[0]], axis=1)
    for i in range(5):
        N, C = h.shape[:2]
        hh, ww = params["sizes"][i]
        h = jax.image.resize(h, (N, C, hh, ww), method="bilinear")
        h = cbr(h, params["w1"][i])
        h = cbr(h, params["w2"][i])
        if i < 4:
            h = jnp.concatenate([h, heatmap[i + 1]], axis=1)
    y = jax.lax.conv_general_dilated(
        h, params["wf"], (1, 1), ((0, 0), (0, 0)),
        dimension_numbers=("NCHW", "OIHW", "NCHW"))
    return y + params["bf"].reshape(1, -1, 1, 1)


if __name__ == "__main__":
    key = jax.random.PRNGKey(0)
    N, in_planes, wh, n_kps = 2, 64, 2, 4   # small Decoder configuration

    # channel / spatial schedule implied by Decoder.__init__ (ratio=1.0)
    cins, couts, sizes = [], [], []
    planes = float(in_planes)
    for i in range(5):
        cins.append(int(planes) + n_kps)
        couts.append(int(planes / 2) if i < 4 else max(int(planes / 2), 32))
        sizes.append((wh * 2 ** (i + 1), wh * 2 ** (i + 1)))
        planes = planes / 2
    final_cin = couts[-1]

    keys = jax.random.split(key, 20)
    ki = iter(keys)
    x0 = jax.random.normal(next(ki), (N, in_planes, wh, wh), jnp.float32)
    heatmap = [
        jax.random.normal(next(ki), (N, n_kps, wh * 2 ** i, wh * 2 ** i),
                          jnp.float32)
        for i in range(5)
    ]
    params = {
        "w1": [jax.random.normal(next(ki), (couts[i], cins[i], 3, 3),
                                 jnp.float32) * 0.1 for i in range(5)],
        "w2": [jax.random.normal(next(ki), (couts[i], couts[i], 3, 3),
                                 jnp.float32) * 0.1 for i in range(5)],
        "wf": jax.random.normal(next(ki), (3, final_cin, 1, 1), jnp.float32) * 0.1,
        "bf": jax.random.normal(next(ki), (3,), jnp.float32) * 0.1,
        "sizes": sizes,
    }

    out = decoder_forward((x0,), heatmap, params)
    out = jax.block_until_ready(out)

    ref = _ref_decoder((x0,), heatmap, params)
    assert out.shape == (N, 3, wh * 32, wh * 32), out.shape
    err = float(jnp.max(jnp.abs(out - ref)))
    assert jnp.allclose(out, ref, atol=1e-3, rtol=1e-3), err
    print("KERNEL_OK")
</pallas_src>

<mosaic_0001>
module attributes {stable_mosaic.version = 11 : i64} {
  func.func @_basic_block_kernel(%arg0: i32, %arg1: memref<1x64x128xf32, #tpu.memory_space<vmem>>, %arg2: memref<1x4x128xf32, #tpu.memory_space<vmem>>, %arg3: memref<9x32x64xf32, #tpu.memory_space<vmem>>, %arg4: memref<9x32x4xf32, #tpu.memory_space<vmem>>, %arg5: memref<9x32x32xf32, #tpu.memory_space<vmem>>, %arg6: memref<1x32x128xf32, #tpu.memory_space<vmem>>) attributes {dimension_semantics = [#tpu.dimension_semantics<parallel>], iteration_bounds = array<i64: 2>, scalar_prefetch = 0 : i64, scratch_operands = 0 : i64, tpu.core_type = #tpu.core_type<tc>, window_params = [{transform_indices = @transform_0, window_bounds = array<i64: 1, 64, 128>}, {transform_indices = @transform_1, window_bounds = array<i64: 1, 4, 128>}, {pipeline_mode = #tpu.pipeline_mode<synchronous>, transform_indices = @transform_2, window_bounds = array<i64: 9, 32, 64>}, {pipeline_mode = #tpu.pipeline_mode<synchronous>, transform_indices = @transform_3, window_bounds = array<i64: 9, 32, 4>}, {pipeline_mode = #tpu.pipeline_mode<synchronous>, transform_indices = @transform_4, window_bounds = array<i64: 9, 32, 32>}, {transform_indices = @transform_5, window_bounds = array<i64: 1, 32, 128>}]} {
    %0 = tpu.iota {dimensions = array<i32: 1>} : vector<1x128xi32>
    %1 = arith.sitofp %0 : vector<1x128xi32> to vector<1x128xf32>
    %cst = arith.constant 5.000000e-01 : f32
    %2 = vector.broadcast %cst : f32 to vector<1x128xf32>
    %3 = arith.addf %1, %2 : vector<1x128xf32>
    %cst_0 = arith.constant 2.500000e-01 : f32
    %4 = vector.broadcast %cst_0 : f32 to vector<1x128xf32>
    %5 = arith.mulf %3, %4 : vector<1x128xf32>
    %6 = math.floor %5 : vector<1x128xf32>
    %7 = arith.fptosi %6 : vector<1x128xf32> to vector<1x128xi32>
    %c4_i32 = arith.constant 4 : i32
    %8 = vector.broadcast %c4_i32 : i32 to vector<1x128xi32>
    %9 = arith.muli %7, %8 : vector<1x128xi32>
    %10 = arith.subi %0, %9 : vector<1x128xi32>
    %c16_i32 = arith.constant 16 : i32
    %11 = vector.broadcast %c16_i32 : i32 to vector<1x128xi32>
    %12 = arith.cmpi slt, %0, %11 : vector<1x128xi32>
    %c-1_i32 = arith.constant -1 : i32
    %13 = vector.broadcast %c-1_i32 : i32 to vector<1x128xi32>
    %14 = arith.addi %7, %13 : vector<1x128xi32>
    %c0_i32 = arith.constant 0 : i32
    %15 = vector.broadcast %c0_i32 : i32 to vector<1x128xi32>
    %16 = arith.cmpi sge, %14, %15 : vector<1x128xi32>
    %c-1_i32_1 = arith.constant -1 : i32
    %17 = vector.broadcast %c-1_i32_1 : i32 to vector<1x128xi32>
    %18 = arith.addi %7, %17 : vector<1x128xi32>
    %c4_i32_2 = arith.constant 4 : i32
    %19 = vector.broadcast %c4_i32_2 : i32 to vector<1x128xi32>
    %20 = arith.cmpi slt, %18, %19 : vector<1x128xi32>
    %21 = arith.andi %16, %20 : vector<1x128xi1>
    %c-1_i32_3 = arith.constant -1 : i32
    %22 = vector.broadcast %c-1_i32_3 : i32 to vector<1x128xi32>
    %23 = arith.addi %10, %22 : vector<1x128xi32>
    %c0_i32_4 = arith.constant 0 : i32
    %24 = vector.broadcast %c0_i32_4 : i32 to vector<1x128xi32>
    %25 = arith.cmpi sge, %23, %24 : vector<1x128xi32>
    %26 = arith.andi %21, %25 : vector<1x128xi1>
    %c-1_i32_5 = arith.constant -1 : i32
    %27 = vector.broadcast %c-1_i32_5 : i32 to vector<1x128xi32>
    %28 = arith.addi %10, %27 : vector<1x128xi32>
    %c4_i32_6 = arith.constant 4 : i32
    %29 = vector.broadcast %c4_i32_6 : i32 to vector<1x128xi32>
    %30 = arith.cmpi slt, %28, %29 : vector<1x128xi32>
    %31 = arith.andi %26, %30 : vector<1x128xi1>
    %32 = arith.andi %31, %12 : vector<1x128xi1>
    %33 = arith.extui %32 : vector<1x128xi1> to vector<1x128xi32>
    %34 = arith.sitofp %33 : vector<1x128xi32> to vector<1x128xf32>
    %c-1_i32_7 = arith.constant -1 : i32
    %35 = vector.broadcast %c-1_i32_7 : i32 to vector<1x128xi32>
    %36 = arith.addi %7, %35 : vector<1x128xi32>
    %c0_i32_8 = arith.constant 0 : i32
    %37 = vector.broadcast %c0_i32_8 : i32 to vector<1x128xi32>
    %38 = arith.cmpi sge, %36, %37 : vector<1x128xi32>
    %c-1_i32_9 = arith.constant -1 : i32
    %39 = vector.broadcast %c-1_i32_9 : i32 to vector<1x128xi32>
    %40 = arith.addi %7, %39 : vector<1x128xi32>
    %c4_i32_10 = arith.constant 4 : i32
    %41 = vector.broadcast %c4_i32_10 : i32 to vector<1x128xi32>
    %42 = arith.cmpi slt, %40, %41 : vector<1x128xi32>
    %43 = arith.andi %38, %42 : vector<1x128xi1>
    %c0_i32_11 = arith.constant 0 : i32
    %44 = vector.broadcast %c0_i32_11 : i32 to vector<1x128xi32>
    %45 = arith.addi %10, %44 : vector<1x128xi32>
    %c0_i32_12 = arith.constant 0 : i32
    %46 = vector.broadcast %c0_i32_12 : i32 to vector<1x128xi32>
    %47 = arith.cmpi sge, %45, %46 : vector<1x128xi32>
    %48 = arith.andi %43, %47 : vector<1x128xi1>
    %c0_i32_13 = arith.constant 0 : i32
    %49 = vector.broadcast %c0_i32_13 : i32 to vector<1x128xi32>
    %50 = arith.addi %10, %49 : vector<1x128xi32>
    %c4_i32_14 = arith.constant 4 : i32
    %51 = vector.broadcast %c4_i32_14 : i32 to vector<1x128xi32>
    %52 = arith.cmpi slt, %50, %51 : vector<1x128xi32>
    %53 = arith.andi %48, %52 : vector<1x128xi1>
    %54 = arith.andi %53, %12 : vector<1x128xi1>
    %55 = arith.extui %54 : vector<1x128xi1> to vector<1x128xi32>
    %56 = arith.sitofp %55 : vector<1x128xi32> to vector<1x128xf32>
    %c-1_i32_15 = arith.constant -1 : i32
    %57 = vector.broadcast %c-1_i32_15 : i32 to vector<1x128xi32>
    %58 = arith.addi %7, %57 : vector<1x128xi32>
    %c0_i32_16 = arith.constant 0 : i32
    %59 = vector.broadcast %c0_i32_16 : i32 to vector<1x128xi32>
    %60 = arith.cmpi sge, %58, %59 : vector<1x128xi32>
    %c-1_i32_17 = arith.constant -1 : i32
    %61 = vector.broadcast %c-1_i32_17 : i32 to vector<1x128xi32>
    %62 = arith.addi %7, %61 : vector<1x128xi32>
    %c4_i32_18 = arith.constant 4 : i32
    %63 = vector.broadcast %c4_i32_18 : i32 to vector<1x128xi32>
    %64 = arith.cmpi slt, %62, %63 : vector<1x128xi32>
    %65 = arith.andi %60, %64 : vector<1x128xi1>
    %c1_i32 = arith.constant 1 : i32
    %66 = vector.broadcast %c1_i32 : i32 to vector<1x128xi32>
    %67 = arith.addi %10, %66 : vector<1x128xi32>
    %c0_i32_19 = arith.constant 0 : i32
    %68 = vector.broadcast %c0_i32_19 : i32 to vector<1x128xi32>
    %69 = arith.cmpi sge, %67, %68 : vector<1x128xi32>
    %70 = arith.andi %65, %69 : vector<1x128xi1>
    %c1_i32_20 = arith.constant 1 : i32
    %71 = vector.broadcast %c1_i32_20 : i32 to vector<1x128xi32>
    %72 = arith.addi %10, %71 : vector<1x128xi32>
    %c4_i32_21 = arith.constant 4 : i32
    %73 = vector.broadcast %c4_i32_21 : i32 to vector<1x128xi32>
    %74 = arith.cmpi slt, %72, %73 : vector<1x128xi32>
    %75 = arith.andi %70, %74 : vector<1x128xi1>
    %76 = arith.andi %75, %12 : vector<1x128xi1>
    %77 = arith.extui %76 : vector<1x128xi1> to vector<1x128xi32>
    %78 = arith.sitofp %77 : vector<1x128xi32> to vector<1x128xf32>
    %c0_i32_22 = arith.constant 0 : i32
    %79 = vector.broadcast %c0_i32_22 : i32 to vector<1x128xi32>
    %80 = arith.addi %7, %79 : vector<1x128xi32>
    %c0_i32_23 = arith.constant 0 : i32
    %81 = vector.broadcast %c0_i32_23 : i32 to vector<1x128xi32>
    %82 = arith.cmpi sge, %80, %81 : vector<1x128xi32>
    %c0_i32_24 = arith.constant 0 : i32
    %83 = vector.broadcast %c0_i32_24 : i32 to vector<1x128xi32>
    %84 = arith.addi %7, %83 : vector<1x128xi32>
    %c4_i32_25 = arith.constant 4 : i32
    %85 = vector.broadcast %c4_i32_25 : i32 to vector<1x128xi32>
    %86 = arith.cmpi slt, %84, %85 : vector<1x128xi32>
    %87 = arith.andi %82, %86 : vector<1x128xi1>
    %c-1_i32_26 = arith.constant -1 : i32
    %88 = vector.broadcast %c-1_i32_26 : i32 to vector<1x128xi32>
    %89 = arith.addi %10, %88 : vector<1x128xi32>
    %c0_i32_27 = arith.constant 0 : i32
    %90 = vector.broadcast %c0_i32_27 : i32 to vector<1x128xi32>
    %91 = arith.cmpi sge, %89, %90 : vector<1x128xi32>
    %92 = arith.andi %87, %91 : vector<1x128xi1>
    %c-1_i32_28 = arith.constant -1 : i32
    %93 = vector.broadcast %c-1_i32_28 : i32 to vector<1x128xi32>
    %94 = arith.addi %10, %93 : vector<1x128xi32>
    %c4_i32_29 = arith.constant 4 : i32
    %95 = vector.broadcast %c4_i32_29 : i32 to vector<1x128xi32>
    %96 = arith.cmpi slt, %94, %95 : vector<1x128xi32>
    %97 = arith.andi %92, %96 : vector<1x128xi1>
    %98 = arith.andi %97, %12 : vector<1x128xi1>
    %99 = arith.extui %98 : vector<1x128xi1> to vector<1x128xi32>
    %100 = arith.sitofp %99 : vector<1x128xi32> to vector<1x128xf32>
    %c0_i32_30 = arith.constant 0 : i32
    %101 = vector.broadcast %c0_i32_30 : i32 to vector<1x128xi32>
    %102 = arith.addi %7, %101 : vector<1x128xi32>
    %c0_i32_31 = arith.constant 0 : i32
    %103 = vector.broadcast %c0_i32_31 : i32 to vector<1x128xi32>
    %104 = arith.cmpi sge, %102, %103 : vector<1x128xi32>
    %c0_i32_32 = arith.constant 0 : i32
    %105 = vector.broadcast %c0_i32_32 : i32 to vector<1x128xi32>
    %106 = arith.addi %7, %105 : vector<1x128xi32>
    %c4_i32_33 = arith.constant 4 : i32
    %107 = vector.broadcast %c4_i32_33 : i32 to vector<1x128xi32>
    %108 = arith.cmpi slt, %106, %107 : vector<1x128xi32>
    %109 = arith.andi %104, %108 : vector<1x128xi1>
    %c0_i32_34 = arith.constant 0 : i32
    %110 = vector.broadcast %c0_i32_34 : i32 to vector<1x128xi32>
    %111 = arith.addi %10, %110 : vector<1x128xi32>
    %c0_i32_35 = arith.constant 0 : i32
    %112 = vector.broadcast %c0_i32_35 : i32 to vector<1x128xi32>
    %113 = arith.cmpi sge, %111, %112 : vector<1x128xi32>
    %114 = arith.andi %109, %113 : vector<1x128xi1>
    %c0_i32_36 = arith.constant 0 : i32
    %115 = vector.broadcast %c0_i32_36 : i32 to vector<1x128xi32>
    %116 = arith.addi %10, %115 : vector<1x128xi32>
    %c4_i32_37 = arith.constant 4 : i32
    %117 = vector.broadcast %c4_i32_37 : i32 to vector<1x128xi32>
    %118 = arith.cmpi slt, %116, %117 : vector<1x128xi32>
    %119 = arith.andi %114, %118 : vector<1x128xi1>
    %120 = arith.andi %119, %12 : vector<1x128xi1>
    %121 = arith.extui %120 : vector<1x128xi1> to vector<1x128xi32>
    %122 = arith.sitofp %121 : vector<1x128xi32> to vector<1x128xf32>
    %c0_i32_38 = arith.constant 0 : i32
    %123 = vector.broadcast %c0_i32_38 : i32 to vector<1x128xi32>
    %124 = arith.addi %7, %123 : vector<1x128xi32>
    %c0_i32_39 = arith.constant 0 : i32
    %125 = vector.broadcast %c0_i32_39 : i32 to vector<1x128xi32>
    %126 = arith.cmpi sge, %124, %125 : vector<1x128xi32>
    %c0_i32_40 = arith.constant 0 : i32
    %127 = vector.broadcast %c0_i32_40 : i32 to vector<1x128xi32>
    %128 = arith.addi %7, %127 : vector<1x128xi32>
    %c4_i32_41 = arith.constant 4 : i32
    %129 = vector.broadcast %c4_i32_41 : i32 to vector<1x128xi32>
    %130 = arith.cmpi slt, %128, %129 : vector<1x128xi32>
    %131 = arith.andi %126, %130 : vector<1x128xi1>
    %c1_i32_42 = arith.constant 1 : i32
    %132 = vector.broadcast %c1_i32_42 : i32 to vector<1x128xi32>
    %133 = arith.addi %10, %132 : vector<1x128xi32>
    %c0_i32_43 = arith.constant 0 : i32
    %134 = vector.broadcast %c0_i32_43 : i32 to vector<1x128xi32>
    %135 = arith.cmpi sge, %133, %134 : vector<1x128xi32>
    %136 = arith.andi %131, %135 : vector<1x128xi1>
    %c1_i32_44 = arith.constant 1 : i32
    %137 = vector.broadcast %c1_i32_44 : i32 to vector<1x128xi32>
    %138 = arith.addi %10, %137 : vector<1x128xi32>
    %c4_i32_45 = arith.constant 4 : i32
    %139 = vector.broadcast %c4_i32_45 : i32 to vector<1x128xi32>
    %140 = arith.cmpi slt, %138, %139 : vector<1x128xi32>
    %141 = arith.andi %136, %140 : vector<1x128xi1>
    %142 = arith.andi %141, %12 : vector<1x128xi1>
    %143 = arith.extui %142 : vector<1x128xi1> to vector<1x128xi32>
    %144 = arith.sitofp %143 : vector<1x128xi32> to vector<1x128xf32>
    %c1_i32_46 = arith.constant 1 : i32
    %145 = vector.broadcast %c1_i32_46 : i32 to vector<1x128xi32>
    %146 = arith.addi %7, %145 : vector<1x128xi32>
    %c0_i32_47 = arith.constant 0 : i32
    %147 = vector.broadcast %c0_i32_47 : i32 to vector<1x128xi32>
    %148 = arith.cmpi sge, %146, %147 : vector<1x128xi32>
    %c1_i32_48 = arith.constant 1 : i32
    %149 = vector.broadcast %c1_i32_48 : i32 to vector<1x128xi32>
    %150 = arith.addi %7, %149 : vector<1x128xi32>
    %c4_i32_49 = arith.constant 4 : i32
    %151 = vector.broadcast %c4_i32_49 : i32 to vector<1x128xi32>
    %152 = arith.cmpi slt, %150, %151 : vector<1x128xi32>
    %153 = arith.andi %148, %152 : vector<1x128xi1>
    %c-1_i32_50 = arith.constant -1 : i32
    %154 = vector.broadcast %c-1_i32_50 : i32 to vector<1x128xi32>
    %155 = arith.addi %10, %154 : vector<1x128xi32>
    %c0_i32_51 = arith.constant 0 : i32
    %156 = vector.broadcast %c0_i32_51 : i32 to vector<1x128xi32>
    %157 = arith.cmpi sge, %155, %156 : vector<1x128xi32>
    %158 = arith.andi %153, %157 : vector<1x128xi1>
    %c-1_i32_52 = arith.constant -1 : i32
    %159 = vector.broadcast %c-1_i32_52 : i32 to vector<1x128xi32>
    %160 = arith.addi %10, %159 : vector<1x128xi32>
    %c4_i32_53 = arith.constant 4 : i32
    %161 = vector.broadcast %c4_i32_53 : i32 to vector<1x128xi32>
    %162 = arith.cmpi slt, %160, %161 : vector<1x128xi32>
    %163 = arith.andi %158, %162 : vector<1x128xi1>
    %164 = arith.andi %163, %12 : vector<1x128xi1>
    %165 = arith.extui %164 : vector<1x128xi1> to vector<1x128xi32>
    %166 = arith.sitofp %165 : vector<1x128xi32> to vector<1x128xf32>
    %c1_i32_54 = arith.constant 1 : i32
    %167 = vector.broadcast %c1_i32_54 : i32 to vector<1x128xi32>
    %168 = arith.addi %7, %167 : vector<1x128xi32>
    %c0_i32_55 = arith.constant 0 : i32
    %169 = vector.broadcast %c0_i32_55 : i32 to vector<1x128xi32>
    %170 = arith.cmpi sge, %168, %169 : vector<1x128xi32>
    %c1_i32_56 = arith.constant 1 : i32
    %171 = vector.broadcast %c1_i32_56 : i32 to vector<1x128xi32>
    %172 = arith.addi %7, %171 : vector<1x128xi32>
    %c4_i32_57 = arith.constant 4 : i32
    %173 = vector.broadcast %c4_i32_57 : i32 to vector<1x128xi32>
    %174 = arith.cmpi slt, %172, %173 : vector<1x128xi32>
    %175 = arith.andi %170, %174 : vector<1x128xi1>
    %c0_i32_58 = arith.constant 0 : i32
    %176 = vector.broadcast %c0_i32_58 : i32 to vector<1x128xi32>
    %177 = arith.addi %10, %176 : vector<1x128xi32>
    %c0_i32_59 = arith.constant 0 : i32
    %178 = vector.broadcast %c0_i32_59 : i32 to vector<1x128xi32>
    %179 = arith.cmpi sge, %177, %178 : vector<1x128xi32>
    %180 = arith.andi %175, %179 : vector<1x128xi1>
    %c0_i32_60 = arith.constant 0 : i32
    %181 = vector.broadcast %c0_i32_60 : i32 to vector<1x128xi32>
    %182 = arith.addi %10, %181 : vector<1x128xi32>
    %c4_i32_61 = arith.constant 4 : i32
    %183 = vector.broadcast %c4_i32_61 : i32 to vector<1x128xi32>
    %184 = arith.cmpi slt, %182, %183 : vector<1x128xi32>
    %185 = arith.andi %180, %184 : vector<1x128xi1>
    %186 = arith.andi %185, %12 : vector<1x128xi1>
    %187 = arith.extui %186 : vector<1x128xi1> to vector<1x128xi32>
    %188 = arith.sitofp %187 : vector<1x128xi32> to vector<1x128xf32>
    %c1_i32_62 = arith.constant 1 : i32
    %189 = vector.broadcast %c1_i32_62 : i32 to vector<1x128xi32>
    %190 = arith.addi %7, %189 : vector<1x128xi32>
    %c0_i32_63 = arith.constant 0 : i32
    %191 = vector.broadcast %c0_i32_63 : i32 to vector<1x128xi32>
    %192 = arith.cmpi sge, %190, %191 : vector<1x128xi32>
    %c1_i32_64 = arith.constant 1 : i32
    %193 = vector.broadcast %c1_i32_64 : i32 to vector<1x128xi32>
    %194 = arith.addi %7, %193 : vector<1x128xi32>
    %c4_i32_65 = arith.constant 4 : i32
    %195 = vector.broadcast %c4_i32_65 : i32 to vector<1x128xi32>
    %196 = arith.cmpi slt, %194, %195 : vector<1x128xi32>
    %197 = arith.andi %192, %196 : vector<1x128xi1>
    %c1_i32_66 = arith.constant 1 : i32
    %198 = vector.broadcast %c1_i32_66 : i32 to vector<1x128xi32>
    %199 = arith.addi %10, %198 : vector<1x128xi32>
    %c0_i32_67 = arith.constant 0 : i32
    %200 = vector.broadcast %c0_i32_67 : i32 to vector<1x128xi32>
    %201 = arith.cmpi sge, %199, %200 : vector<1x128xi32>
    %202 = arith.andi %197, %201 : vector<1x128xi1>
    %c1_i32_68 = arith.constant 1 : i32
    %203 = vector.broadcast %c1_i32_68 : i32 to vector<1x128xi32>
    %204 = arith.addi %10, %203 : vector<1x128xi32>
    %c4_i32_69 = arith.constant 4 : i32
    %205 = vector.broadcast %c4_i32_69 : i32 to vector<1x128xi32>
    %206 = arith.cmpi slt, %204, %205 : vector<1x128xi32>
    %207 = arith.andi %202, %206 : vector<1x128xi1>
    %208 = arith.andi %207, %12 : vector<1x128xi1>
    %209 = arith.extui %208 : vector<1x128xi1> to vector<1x128xi32>
    %210 = arith.sitofp %209 : vector<1x128xi32> to vector<1x128xf32>
    %c0 = arith.constant 0 : index
    %c0_70 = arith.constant 0 : index
    %c0_71 = arith.constant 0 : index
    %211 = vector.load %arg1[%c0, %c0_70, %c0_71] : memref<1x64x128xf32, #tpu.memory_space<vmem>>, vector<1x64x128xf32>
    %212 = vector.shape_cast %211 : vector<1x64x128xf32> to vector<64x128xf32>
    %c0_72 = arith.constant 0 : index
    %c0_73 = arith.constant 0 : index
    %c0_74 = arith.constant 0 : index
    %213 = vector.load %arg2[%c0_72, %c0_73, %c0_74] : memref<1x4x128xf32, #tpu.memory_space<vmem>>, vector<1x4x128xf32>
    %214 = vector.shape_cast %213 : vector<1x4x128xf32> to vector<4x128xf32>
    %c0_75 = arith.constant 0 : index
    %c0_76 = arith.constant 0 : index
    %c0_77 = arith.constant 0 : index
    %215 = vector.load %arg3[%c0_75, %c0_76, %c0_77] : memref<9x32x64xf32, #tpu.memory_space<vmem>>, vector<1x32x64xf32>
    %216 = vector.shape_cast %215 : vector<1x32x64xf32> to vector<32x64xf32>
    %c5_i32 = arith.constant 5 : i32
    %217 = tpu.dynamic_rotate %212 by %c5_i32 dim 1 : vector<64x128xf32>, i32 -> vector<64x128xf32>
    %218 = vector.broadcast %34 : vector<1x128xf32> to vector<64x128xf32>
    %219 = arith.mulf %217, %218 : vector<64x128xf32>
    %cst_78 = arith.constant dense<0.000000e+00> : vector<32x128xf32>
    %220 = tpu.matmul %216, %219, %cst_78 {dimension_numbers = #tpu.dot_dimension_numbers<[1], [0], [0], [1], [0, 0, 1, 1], [], []>} : vector<32x64xf32>, vector<64x128xf32>, vector<32x128xf32> -> vector<32x128xf32>
    %c0_79 = arith.constant 0 : index
    %c0_80 = arith.constant 0 : index
    %c0_81 = arith.constant 0 : index
    %221 = vector.load %arg4[%c0_79, %c0_80, %c0_81] : memref<9x32x4xf32, #tpu.memory_space<vmem>>, vector<1x32x4xf32>
    %222 = vector.shape_cast %221 : vector<1x32x4xf32> to vector<32x4xf32>
    %c5_i32_82 = arith.constant 5 : i32
    %223 = tpu.dynamic_rotate %214 by %c5_i32_82 dim 1 : vector<4x128xf32>, i32 -> vector<4x128xf32>
    %224 = vector.broadcast %34 : vector<1x128xf32> to vector<4x128xf32>
    %225 = arith.mulf %223, %224 : vector<4x128xf32>
    %cst_83 = arith.constant dense<0.000000e+00> : vector<32x128xf32>
    %226 = tpu.matmul %222, %225, %cst_83 {dimension_numbers = #tpu.dot_dimension_numbers<[1], [0], [0], [1], [0, 0, 1, 1], [], []>} : vector<32x4xf32>, vector<4x128xf32>, vector<32x128xf32> -> vector<32x128xf32>
    %227 = arith.addf %220, %226 : vector<32x128xf32>
    %c1 = arith.constant 1 : index
    %c0_84 = arith.constant 0 : index
    %c0_85 = arith.constant 0 : index
    %228 = vector.load %arg3[%c1, %c0_84, %c0_85] : memref<9x32x64xf32, #tpu.memory_space<vmem>>, vector<1x32x64xf32>
    %229 = vector.shape_cast %228 : vector<1x32x64xf32> to vector<32x64xf32>
    %c4_i32_86 = arith.constant 4 : i32
    %230 = tpu.dynamic_rotate %212 by %c4_i32_86 dim 1 : vector<64x128xf32>, i32 -> vector<64x128xf32>
    %231 = vector.broadcast %56 : vector<1x128xf32> to vector<64x128xf32>
    %232 = arith.mulf %230, %231 : vector<64x128xf32>
    %cst_87 = arith.constant dense<0.000000e+00> : vector<32x128xf32>
    %233 = tpu.matmul %229, %232, %cst_87 {dimension_numbers = #tpu.dot_dimension_numbers<[1], [0], [0], [1], [0, 0, 1, 1], [], []>} : vector<32x64xf32>, vector<64x128xf32>, vector<32x128xf32> -> vector<32x128xf32>
    %234 = arith.addf %227, %233 : vector<32x128xf32>
    %c1_88 = arith.constant 1 : index
    %c0_89 = arith.constant 0 : index
    %c0_90 = arith.constant 0 : index
    %235 = vector.load %arg4[%c1_88, %c0_89, %c0_90] : memref<9x32x4xf32, #tpu.memory_space<vmem>>, vector<1x32x4xf32>
    %236 = vector.shape_cast %235 : vector<1x32x4xf32> to vector<32x4xf32>
    %c4_i32_91 = arith.constant 4 : i32
    %237 = tpu.dynamic_rotate %214 by %c4_i32_91 dim 1 : vector<4x128xf32>, i32 -> vector<4x128xf32>
    %238 = vector.broadcast %56 : vector<1x128xf32> to vector<4x128xf32>
    %239 = arith.mulf %237, %238 : vector<4x128xf32>
    %cst_92 = arith.constant dense<0.000000e+00> : vector<32x128xf32>
    %240 = tpu.matmul %236, %239, %cst_92 {dimension_numbers = #tpu.dot_dimension_numbers<[1], [0], [0], [1], [0, 0, 1, 1], [], []>} : vector<32x4xf32>, vector<4x128xf32>, vector<32x128xf32> -> vector<32x128xf32>
    %241 = arith.addf %234, %240 : vector<32x128xf32>
    %c2 = arith.constant 2 : index
    %c0_93 = arith.constant 0 : index
    %c0_94 = arith.constant 0 : index
    %242 = vector.load %arg3[%c2, %c0_93, %c0_94] : memref<9x32x64xf32, #tpu.memory_space<vmem>>, vector<1x32x64xf32>
    %243 = vector.shape_cast %242 : vector<1x32x64xf32> to vector<32x64xf32>
    %c3_i32 = arith.constant 3 : i32
    %244 = tpu.dynamic_rotate %212 by %c3_i32 dim 1 : vector<64x128xf32>, i32 -> vector<64x128xf32>
    %245 = vector.broadcast %78 : vector<1x128xf32> to vector<64x128xf32>
    %246 = arith.mulf %244, %245 : vector<64x128xf32>
    %cst_95 = arith.constant dense<0.000000e+00> : vector<32x128xf32>
    %247 = tpu.matmul %243, %246, %cst_95 {dimension_numbers = #tpu.dot_dimension_numbers<[1], [0], [0], [1], [0, 0, 1, 1], [], []>} : vector<32x64xf32>, vector<64x128xf32>, vector<32x128xf32> -> vector<32x128xf32>
    %248 = arith.addf %241, %247 : vector<32x128xf32>
    %c2_96 = arith.constant 2 : index
    %c0_97 = arith.constant 0 : index
    %c0_98 = arith.constant 0 : index
    %249 = vector.load %arg4[%c2_96, %c0_97, %c0_98] : memref<9x32x4xf32, #tpu.memory_space<vmem>>, vector<1x32x4xf32>
    %250 = vector.shape_cast %249 : vector<1x32x4xf32> to vector<32x4xf32>
    %c3_i32_99 = arith.constant 3 : i32
    %251 = tpu.dynamic_rotate %214 by %c3_i32_99 dim 1 : vector<4x128xf32>, i32 -> vector<4x128xf32>
    %252 = vector.broadcast %78 : vector<1x128xf32> to vector<4x128xf32>
    %253 = arith.mulf %251, %252 : vector<4x128xf32>
    %cst_100 = arith.constant dense<0.000000e+00> : vector<32x128xf32>
    %254 = tpu.matmul %250, %253, %cst_100 {dimension_numbers = #tpu.dot_dimension_numbers<[1], [0], [0], [1], [0, 0, 1, 1], [], []>} : vector<32x4xf32>, vector<4x128xf32>, vector<32x128xf32> -> vector<32x128xf32>
    %255 = arith.addf %248, %254 : vector<32x128xf32>
    %c3 = arith.constant 3 : index
    %c0_101 = arith.constant 0 : index
    %c0_102 = arith.constant 0 : index
    %256 = vector.load %arg3[%c3, %c0_101, %c0_102] : memref<9x32x64xf32, #tpu.memory_space<vmem>>, vector<1x32x64xf32>
    %257 = vector.shape_cast %256 : vector<1x32x64xf32> to vector<32x64xf32>
    %c1_i32_103 = arith.constant 1 : i32
    %258 = tpu.dynamic_rotate %212 by %c1_i32_103 dim 1 : vector<64x128xf32>, i32 -> vector<64x128xf32>
    %259 = vector.broadcast %100 : vector<1x128xf32> to vector<64x128xf32>
    %260 = arith.mulf %258, %259 : vector<64x128xf32>
    %cst_104 = arith.constant dense<0.000000e+00> : vector<32x128xf32>
    %261 = tpu.matmul %257, %260, %cst_104 {dimension_numbers = #tpu.dot_dimension_numbers<[1], [0], [0], [1], [0, 0, 1, 1], [], []>} : vector<32x64xf32>, vector<64x128xf32>, vector<32x128xf32> -> vector<32x128xf32>
    %262 = arith.addf %255, %261 : vector<32x128xf32>
    %c3_105 = arith.constant 3 : index
    %c0_106 = arith.constant 0 : index
    %c0_107 = arith.constant 0 : index
    %263 = vector.load %arg4[%c3_105, %c0_106, %c0_107] : memref<9x32x4xf32, #tpu.memory_space<vmem>>, vector<1x32x4xf32>
    %264 = vector.shape_cast %263 : vector<1x32x4xf32> to vector<32x4xf32>
    %c1_i32_108 = arith.constant 1 : i32
    %265 = tpu.dynamic_rotate %214 by %c1_i32_108 dim 1 : vector<4x128xf32>, i32 -> vector<4x128xf32>
    %266 = vector.broadcast %100 : vector<1x128xf32> to vector<4x128xf32>
    %267 = arith.mulf %265, %266 : vector<4x128xf32>
    %cst_109 = arith.constant dense<0.000000e+00> : vector<32x128xf32>
    %268 = tpu.matmul %264, %267, %cst_109 {dimension_numbers = #tpu.dot_dimension_numbers<[1], [0], [0], [1], [0, 0, 1, 1], [], []>} : vector<32x4xf32>, vector<4x128xf32>, vector<32x128xf32> -> vector<32x128xf32>
    %269 = arith.addf %262, %268 : vector<32x128xf32>
    %c4 = arith.constant 4 : index
    %c0_110 = arith.constant 0 : index
    %c0_111 = arith.constant 0 : index
    %270 = vector.load %arg3[%c4, %c0_110, %c0_111] : memref<9x32x64xf32, #tpu.memory_space<vmem>>, vector<1x32x64xf32>
    %271 = vector.shape_cast %270 : vector<1x32x64xf32> to vector<32x64xf32>
    %272 = vector.broadcast %122 : vector<1x128xf32> to vector<64x128xf32>
    %273 = arith.mulf %212, %272 : vector<64x128xf32>
    %cst_112 = arith.constant dense<0.000000e+00> : vector<32x128xf32>
    %274 = tpu.matmul %271, %273, %cst_112 {dimension_numbers = #tpu.dot_dimension_numbers<[1], [0], [0], [1], [0, 0, 1, 1], [], []>} : vector<32x64xf32>, vector<64x128xf32>, vector<32x128xf32> -> vector<32x128xf32>
    %275 = arith.addf %269, %274 : vector<32x128xf32>
    %c4_113 = arith.constant 4 : index
    %c0_114 = arith.constant 0 : index
    %c0_115 = arith.constant 0 : index
    %276 = vector.load %arg4[%c4_113, %c0_114, %c0_115] : memref<9x32x4xf32, #tpu.memory_space<vmem>>, vector<1x32x4xf32>
    %277 = vector.shape_cast %276 : vector<1x32x4xf32> to vector<32x4xf32>
    %278 = vector.broadcast %122 : vector<1x128xf32> to vector<4x128xf32>
    %279 = arith.mulf %214, %278 : vector<4x128xf32>
    %cst_116 = arith.constant dense<0.000000e+00> : vector<32x128xf32>
    %280 = tpu.matmul %277, %279, %cst_116 {dimension_numbers = #tpu.dot_dimension_numbers<[1], [0], [0], [1], [0, 0, 1, 1], [], []>} : vector<32x4xf32>, vector<4x128xf32>, vector<32x128xf32> -> vector<32x128xf32>
    %281 = arith.addf %275, %280 : vector<32x128xf32>
    %c5 = arith.constant 5 : index
    %c0_117 = arith.constant 0 : index
    %c0_118 = arith.constant 0 : index
    %282 = vector.load %arg3[%c5, %c0_117, %c0_118] : memref<9x32x64xf32, #tpu.memory_space<vmem>>, vector<1x32x64xf32>
    %283 = vector.shape_cast %282 : vector<1x32x64xf32> to vector<32x64xf32>
    %c127_i32 = arith.constant 127 : i32
    %284 = tpu.dynamic_rotate %212 by %c127_i32 dim 1 : vector<64x128xf32>, i32 -> vector<64x128xf32>
    %285 = vector.broadcast %144 : vector<1x128xf32> to vector<64x128xf32>
    %286 = arith.mulf %284, %285 : vector<64x128xf32>
    %cst_119 = arith.constant dense<0.000000e+00> : vector<32x128xf32>
    %287 = tpu.matmul %283, %286, %cst_119 {dimension_numbers = #tpu.dot_dimension_numbers<[1], [0], [0], [1], [0, 0, 1, 1], [], []>} : vector<32x64xf32>, vector<64x128xf32>, vector<32x128xf32> -> vector<32x128xf32>
    %288 = arith.addf %281, %287 : vector<32x128xf32>
    %c5_120 = arith.constant 5 : index
    %c0_121 = arith.constant 0 : index
    %c0_122 = arith.constant 0 : index
    %289 = vector.load %arg4[%c5_120, %c0_121, %c0_122] : memref<9x32x4xf32, #tpu.memory_space<vmem>>, vector<1x32x4xf32>
    %290 = vector.shape_cast %289 : vector<1x32x4xf32> to vector<32x4xf32>
    %c127_i32_123 = arith.constant 127 : i32
    %291 = tpu.dynamic_rotate %214 by %c127_i32_123 dim 1 : vector<4x128xf32>, i32 -> vector<4x128xf32>
    %292 = vector.broadcast %144 : vector<1x128xf32> to vector<4x128xf32>
    %293 = arith.mulf %291, %292 : vector<4x128xf32>
    %cst_124 = arith.constant dense<0.000000e+00> : vector<32x128xf32>
    %294 = tpu.matmul %290, %293, %cst_124 {dimension_numbers = #tpu.dot_dimension_numbers<[1], [0], [0], [1], [0, 0, 1, 1], [], []>} : vector<32x4xf32>, vector<4x128xf32>, vector<32x128xf32> -> vector<32x128xf32>
    %295 = arith.addf %288, %294 : vector<32x128xf32>
    %c6 = arith.constant 6 : index
    %c0_125 = arith.constant 0 : index
    %c0_126 = arith.constant 0 : index
    %296 = vector.load %arg3[%c6, %c0_125, %c0_126] : memref<9x32x64xf32, #tpu.memory_space<vmem>>, vector<1x32x64xf32>
    %297 = vector.shape_cast %296 : vector<1x32x64xf32> to vector<32x64xf32>
    %c125_i32 = arith.constant 125 : i32
    %298 = tpu.dynamic_rotate %212 by %c125_i32 dim 1 : vector<64x128xf32>, i32 -> vector<64x128xf32>
    %299 = vector.broadcast %166 : vector<1x128xf32> to vector<64x128xf32>
    %300 = arith.mulf %298, %299 : vector<64x128xf32>
    %cst_127 = arith.constant dense<0.000000e+00> : vector<32x128xf32>
    %301 = tpu.matmul %297, %300, %cst_127 {dimension_numbers = #tpu.dot_dimension_numbers<[1], [0], [0], [1], [0, 0, 1, 1], [], []>} : vector<32x64xf32>, vector<64x128xf32>, vector<32x128xf32> -> vector<32x128xf32>
    %302 = arith.addf %295, %301 : vector<32x128xf32>
    %c6_128 = arith.constant 6 : index
    %c0_129 = arith.constant 0 : index
    %c0_130 = arith.constant 0 : index
    %303 = vector.load %arg4[%c6_128, %c0_129, %c0_130] : memref<9x32x4xf32, #tpu.memory_space<vmem>>, vector<1x32x4xf32>
    %304 = vector.shape_cast %303 : vector<1x32x4xf32> to vector<32x4xf32>
    %c125_i32_131 = arith.constant 125 : i32
    %305 = tpu.dynamic_rotate %214 by %c125_i32_131 dim 1 : vector<4x128xf32>, i32 -> vector<4x128xf32>
    %306 = vector.broadcast %166 : vector<1x128xf32> to vector<4x128xf32>
    %307 = arith.mulf %305, %306 : vector<4x128xf32>
    %cst_132 = arith.constant dense<0.000000e+00> : vector<32x128xf32>
    %308 = tpu.matmul %304, %307, %cst_132 {dimension_numbers = #tpu.dot_dimension_numbers<[1], [0], [0], [1], [0, 0, 1, 1], [], []>} : vector<32x4xf32>, vector<4x128xf32>, vector<32x128xf32> -> vector<32x128xf32>
    %309 = arith.addf %302, %308 : vector<32x128xf32>
    %c7 = arith.constant 7 : index
    %c0_133 = arith.constant 0 : index
    %c0_134 = arith.constant 0 : index
    %310 = vector.load %arg3[%c7, %c0_133, %c0_134] : memref<9x32x64xf32, #tpu.memory_space<vmem>>, vector<1x32x64xf32>
    %311 = vector.shape_cast %310 : vector<1x32x64xf32> to vector<32x64xf32>
    %c124_i32 = arith.constant 124 : i32
    %312 = tpu.dynamic_rotate %212 by %c124_i32 dim 1 : vector<64x128xf32>, i32 -> vector<64x128xf32>
    %313 = vector.broadcast %188 : vector<1x128xf32> to vector<64x128xf32>
    %314 = arith.mulf %312, %313 : vector<64x128xf32>
    %cst_135 = arith.constant dense<0.000000e+00> : vector<32x128xf32>
    %315 = tpu.matmul %311, %314, %cst_135 {dimension_numbers = #tpu.dot_dimension_numbers<[1], [0], [0], [1], [0, 0, 1, 1], [], []>} : vector<32x64xf32>, vector<64x128xf32>, vector<32x128xf32> -> vector<32x128xf32>
    %316 = arith.addf %309, %315 : vector<32x128xf32>
    %c7_136 = arith.constant 7 : index
    %c0_137 = arith.constant 0 : index
    %c0_138 = arith.constant 0 : index
    %317 = vector.load %arg4[%c7_136, %c0_137, %c0_138] : memref<9x32x4xf32, #tpu.memory_space<vmem>>, vector<1x32x4xf32>
    %318 = vector.shape_cast %317 : vector<1x32x4xf32> to vector<32x4xf32>
    %c124_i32_139 = arith.constant 124 : i32
    %319 = tpu.dynamic_rotate %214 by %c124_i32_139 dim 1 : vector<4x128xf32>, i32 -> vector<4x128xf32>
    %320 = vector.broadcast %188 : vector<1x128xf32> to vector<4x128xf32>
    %321 = arith.mulf %319, %320 : vector<4x128xf32>
    %cst_140 = arith.constant dense<0.000000e+00> : vector<32x128xf32>
    %322 = tpu.matmul %318, %321, %cst_140 {dimension_numbers = #tpu.dot_dimension_numbers<[1], [0], [0], [1], [0, 0, 1, 1], [], []>} : vector<32x4xf32>, vector<4x128xf32>, vector<32x128xf32> -> vector<32x128xf32>
    %323 = arith.addf %316, %322 : vector<32x128xf32>
    %c8 = arith.constant 8 : index
    %c0_141 = arith.constant 0 : index
    %c0_142 = arith.constant 0 : index
    %324 = vector.load %arg3[%c8, %c0_141, %c0_142] : memref<9x32x64xf32, #tpu.memory_space<vmem>>, vector<1x32x64xf32>
    %325 = vector.shape_cast %324 : vector<1x32x64xf32> to vector<32x64xf32>
    %c123_i32 = arith.constant 123 : i32
    %326 = tpu.dynamic_rotate %212 by %c123_i32 dim 1 : vector<64x128xf32>, i32 -> vector<64x128xf32>
    %327 = vector.broadcast %210 : vector<1x128xf32> to vector<64x128xf32>
    %328 = arith.mulf %326, %327 : vector<64x128xf32>
    %cst_143 = arith.constant dense<0.000000e+00> : vector<32x128xf32>
    %329 = tpu.matmul %325, %328, %cst_143 {dimension_numbers = #tpu.dot_dimension_numbers<[1], [0], [0], [1], [0, 0, 1, 1], [], []>} : vector<32x64xf32>, vector<64x128xf32>, vector<32x128xf32> -> vector<32x128xf32>
    %330 = arith.addf %323, %329 : vector<32x128xf32>
    %c8_144 = arith.constant 8 : index
    %c0_145 = arith.constant 0 : index
    %c0_146 = arith.constant 0 : index
    %331 = vector.load %arg4[%c8_144, %c0_145, %c0_146] : memref<9x32x4xf32, #tpu.memory_space<vmem>>, vector<1x32x4xf32>
    %332 = vector.shape_cast %331 : vector<1x32x4xf32> to vector<32x4xf32>
    %c123_i32_147 = arith.constant 123 : i32
    %333 = tpu.dynamic_rotate %214 by %c123_i32_147 dim 1 : vector<4x128xf32>, i32 -> vector<4x128xf32>
    %334 = vector.broadcast %210 : vector<1x128xf32> to vector<4x128xf32>
    %335 = arith.mulf %333, %334 : vector<4x128xf32>
    %cst_148 = arith.constant dense<0.000000e+00> : vector<32x128xf32>
    %336 = tpu.matmul %332, %335, %cst_148 {dimension_numbers = #tpu.dot_dimension_numbers<[1], [0], [0], [1], [0, 0, 1, 1], [], []>} : vector<32x4xf32>, vector<4x128xf32>, vector<32x128xf32> -> vector<32x128xf32>
    %337 = arith.addf %330, %336 : vector<32x128xf32>
    %338 = vector.shape_cast %337 : vector<32x128xf32> to vector<1x32x128xf32>
    %cst_149 = arith.constant dense<0.000000e+00> : vector<1xf32>
    %339 = vector.multi_reduction <add>, %338, %cst_149 [1, 2] : vector<1x32x128xf32> to vector<1xf32>
    %340 = vector.shape_cast %339 : vector<1xf32> to vector<1x1x1xf32>
    %341 = vector.extract %340[0, 0, 0] : f32 from vector<1x1x1xf32>
    %342 = arith.mulf %337, %337 : vector<32x128xf32>
    %343 = vector.shape_cast %342 : vector<32x128xf32> to vector<1x32x128xf32>
    %cst_150 = arith.constant dense<0.000000e+00> : vector<1xf32>
    %344 = vector.multi_reduction <add>, %343, %cst_150 [1, 2] : vector<1x32x128xf32> to vector<1xf32>
    %345 = vector.shape_cast %344 : vector<1xf32> to vector<1x1x1xf32>
    %346 = vector.extract %345[0, 0, 0] : f32 from vector<1x1x1xf32>
    %cst_151 = arith.constant 5.120000e+02 : f32
    %347 = arith.divf %341, %cst_151 : f32
    %cst_152 = arith.constant 5.120000e+02 : f32
    %348 = arith.divf %346, %cst_152 : f32
    %349 = arith.mulf %347, %347 : f32
    %350 = arith.subf %348, %349 : f32
    %cst_153 = arith.constant 9.99999974E-6 : f32
    %351 = arith.addf %350, %cst_153 : f32
    %352 = math.rsqrt %351 : f32
    %353 = vector.broadcast %347 : f32 to vector<32x128xf32>
    %354 = arith.subf %337, %353 : vector<32x128xf32>
    %355 = vector.broadcast %352 : f32 to vector<32x128xf32>
    %356 = arith.mulf %354, %355 : vector<32x128xf32>
    %cst_154 = arith.constant 0.000000e+00 : f32
    %357 = vector.broadcast %cst_154 : f32 to vector<32x128xf32>
    %358 = arith.maximumf %356, %357 : vector<32x128xf32>
    %c0_155 = arith.constant 0 : index
    %c0_156 = arith.constant 0 : index
    %c0_157 = arith.constant 0 : index
    %359 = vector.load %arg5[%c0_155, %c0_156, %c0_157] : memref<9x32x32xf32, #tpu.memory_space<vmem>>, vector<1x32x32xf32>
    %360 = vector.shape_cast %359 : vector<1x32x32xf32> to vector<32x32xf32>
    %c5_i32_158 = arith.constant 5 : i32
    %361 = tpu.dynamic_rotate %358 by %c5_i32_158 dim 1 : vector<32x128xf32>, i32 -> vector<32x128xf32>
    %362 = vector.broadcast %34 : vector<1x128xf32> to vector<32x128xf32>
    %363 = arith.mulf %361, %362 : vector<32x128xf32>
    %cst_159 = arith.constant dense<0.000000e+00> : vector<32x128xf32>
    %364 = tpu.matmul %360, %363, %cst_159 {dimension_numbers = #tpu.dot_dimension_numbers<[1], [0], [0], [1], [0, 0, 1, 1], [], []>} : vector<32x32xf32>, vector<32x128xf32>, vector<32x128xf32> -> vector<32x128xf32>
    %c1_160 = arith.constant 1 : index
    %c0_161 = arith.constant 0 : index
    %c0_162 = arith.constant 0 : index
    %365 = vector.load %arg5[%c1_160, %c0_161, %c0_162] : memref<9x32x32xf32, #tpu.memory_space<vmem>>, vector<1x32x32xf32>
    %366 = vector.shape_cast %365 : vector<1x32x32xf32> to vector<32x32xf32>
    %c4_i32_163 = arith.constant 4 : i32
    %367 = tpu.dynamic_rotate %358 by %c4_i32_163 dim 1 : vector<32x128xf32>, i32 -> vector<32x128xf32>
    %368 = vector.broadcast %56 : vector<1x128xf32> to vector<32x128xf32>
    %369 = arith.mulf %367, %368 : vector<32x128xf32>
    %cst_164 = arith.constant dense<0.000000e+00> : vector<32x128xf32>
    %370 = tpu.matmul %366, %369, %cst_164 {dimension_numbers = #tpu.dot_dimension_numbers<[1], [0], [0], [1], [0, 0, 1, 1], [], []>} : vector<32x32xf32>, vector<32x128xf32>, vector<32x128xf32> -> vector<32x128xf32>
    %371 = arith.addf %364, %370 : vector<32x128xf32>
    %c2_165 = arith.constant 2 : index
    %c0_166 = arith.constant 0 : index
    %c0_167 = arith.constant 0 : index
    %372 = vector.load %arg5[%c2_165, %c0_166, %c0_167] : memref<9x32x32xf32, #tpu.memory_space<vmem>>, vector<1x32x32xf32>
    %373 = vector.shape_cast %372 : vector<1x32x32xf32> to vector<32x32xf32>
    %c3_i32_168 = arith.constant 3 : i32
    %374 = tpu.dynamic_rotate %358 by %c3_i32_168 dim 1 : vector<32x128xf32>, i32 -> vector<32x128xf32>
    %375 = vector.broadcast %78 : vector<1x128xf32> to vector<32x128xf32>
    %376 = arith.mulf %374, %375 : vector<32x128xf32>
    %cst_169 = arith.constant dense<0.000000e+00> : vector<32x128xf32>
    %377 = tpu.matmul %373, %376, %cst_169 {dimension_numbers = #tpu.dot_dimension_numbers<[1], [0], [0], [1], [0, 0, 1, 1], [], []>} : vector<32x32xf32>, vector<32x128xf32>, vector<32x128xf32> -> vector<32x128xf32>
    %378 = arith.addf %371, %377 : vector<32x128xf32>
    %c3_170 = arith.constant 3 : index
    %c0_171 = arith.constant 0 : index
    %c0_172 = arith.constant 0 : index
    %379 = vector.load %arg5[%c3_170, %c0_171, %c0_172] : memref<9x32x32xf32, #tpu.memory_space<vmem>>, vector<1x32x32xf32>
    %380 = vector.shape_cast %379 : vector<1x32x32xf32> to vector<32x32xf32>
    %c1_i32_173 = arith.constant 1 : i32
    %381 = tpu.dynamic_rotate %358 by %c1_i32_173 dim 1 : vector<32x128xf32>, i32 -> vector<32x128xf32>
    %382 = vector.broadcast %100 : vector<1x128xf32> to vector<32x128xf32>
    %383 = arith.mulf %381, %382 : vector<32x128xf32>
    %cst_174 = arith.constant dense<0.000000e+00> : vector<32x128xf32>
    %384 = tpu.matmul %380, %383, %cst_174 {dimension_numbers = #tpu.dot_dimension_numbers<[1], [0], [0], [1], [0, 0, 1, 1], [], []>} : vector<32x32xf32>, vector<32x128xf32>, vector<32x128xf32> -> vector<32x128xf32>
    %385 = arith.addf %378, %384 : vector<32x128xf32>
    %c4_175 = arith.constant 4 : index
    %c0_176 = arith.constant 0 : index
    %c0_177 = arith.constant 0 : index
    %386 = vector.load %arg5[%c4_175, %c0_176, %c0_177] : memref<9x32x32xf32, #tpu.memory_space<vmem>>, vector<1x32x32xf32>
    %387 = vector.shape_cast %386 : vector<1x32x32xf32> to vector<32x32xf32>
    %388 = vector.broadcast %122 : vector<1x128xf32> to vector<32x128xf32>
    %389 = arith.mulf %358, %388 : vector<32x128xf32>
    %cst_178 = arith.constant dense<0.000000e+00> : vector<32x128xf32>
    %390 = tpu.matmul %387, %389, %cst_178 {dimension_numbers = #tpu.dot_dimension_numbers<[1], [0], [0], [1], [0, 0, 1, 1], [], []>} : vector<32x32xf32>, vector<32x128xf32>, vector<32x128xf32> -> vector<32x128xf32>
    %391 = arith.addf %385, %390 : vector<32x128xf32>
    %c5_179 = arith.constant 5 : index
    %c0_180 = arith.constant 0 : index
    %c0_181 = arith.constant 0 : index
    %392 = vector.load %arg5[%c5_179, %c0_180, %c0_181] : memref<9x32x32xf32, #tpu.memory_space<vmem>>, vector<1x32x32xf32>
    %393 = vector.shape_cast %392 : vector<1x32x32xf32> to vector<32x32xf32>
    %c127_i32_182 = arith.constant 127 : i32
    %394 = tpu.dynamic_rotate %358 by %c127_i32_182 dim 1 : vector<32x128xf32>, i32 -> vector<32x128xf32>
    %395 = vector.broadcast %144 : vector<1x128xf32> to vector<32x128xf32>
    %396 = arith.mulf %394, %395 : vector<32x128xf32>
    %cst_183 = arith.constant dense<0.000000e+00> : vector<32x128xf32>
    %397 = tpu.matmul %393, %396, %cst_183 {dimension_numbers = #tpu.dot_dimension_numbers<[1], [0], [0], [1], [0, 0, 1, 1], [], []>} : vector<32x32xf32>, vector<32x128xf32>, vector<32x128xf32> -> vector<32x128xf32>
    %398 = arith.addf %391, %397 : vector<32x128xf32>
    %c6_184 = arith.constant 6 : index
    %c0_185 = arith.constant 0 : index
    %c0_186 = arith.constant 0 : index
    %399 = vector.load %arg5[%c6_184, %c0_185, %c0_186] : memref<9x32x32xf32, #tpu.memory_space<vmem>>, vector<1x32x32xf32>
    %400 = vector.shape_cast %399 : vector<1x32x32xf32> to vector<32x32xf32>
    %c125_i32_187 = arith.constant 125 : i32
    %401 = tpu.dynamic_rotate %358 by %c125_i32_187 dim 1 : vector<32x128xf32>, i32 -> vector<32x128xf32>
    %402 = vector.broadcast %166 : vector<1x128xf32> to vector<32x128xf32>
    %403 = arith.mulf %401, %402 : vector<32x128xf32>
    %cst_188 = arith.constant dense<0.000000e+00> : vector<32x128xf32>
    %404 = tpu.matmul %400, %403, %cst_188 {dimension_numbers = #tpu.dot_dimension_numbers<[1], [0], [0], [1], [0, 0, 1, 1], [], []>} : vector<32x32xf32>, vector<32x128xf32>, vector<32x128xf32> -> vector<32x128xf32>
    %405 = arith.addf %398, %404 : vector<32x128xf32>
    %c7_189 = arith.constant 7 : index
    %c0_190 = arith.constant 0 : index
    %c0_191 = arith.constant 0 : index
    %406 = vector.load %arg5[%c7_189, %c0_190, %c0_191] : memref<9x32x32xf32, #tpu.memory_space<vmem>>, vector<1x32x32xf32>
    %407 = vector.shape_cast %406 : vector<1x32x32xf32> to vector<32x32xf32>
    %c124_i32_192 = arith.constant 124 : i32
    %408 = tpu.dynamic_rotate %358 by %c124_i32_192 dim 1 : vector<32x128xf32>, i32 -> vector<32x128xf32>
    %409 = vector.broadcast %188 : vector<1x128xf32> to vector<32x128xf32>
    %410 = arith.mulf %408, %409 : vector<32x128xf32>
    %cst_193 = arith.constant dense<0.000000e+00> : vector<32x128xf32>
    %411 = tpu.matmul %407, %410, %cst_193 {dimension_numbers = #tpu.dot_dimension_numbers<[1], [0], [0], [1], [0, 0, 1, 1], [], []>} : vector<32x32xf32>, vector<32x128xf32>, vector<32x128xf32> -> vector<32x128xf32>
    %412 = arith.addf %405, %411 : vector<32x128xf32>
    %c8_194 = arith.constant 8 : index
    %c0_195 = arith.constant 0 : index
    %c0_196 = arith.constant 0 : index
    %413 = vector.load %arg5[%c8_194, %c0_195, %c0_196] : memref<9x32x32xf32, #tpu.memory_space<vmem>>, vector<1x32x32xf32>
    %414 = vector.shape_cast %413 : vector<1x32x32xf32> to vector<32x32xf32>
    %c123_i32_197 = arith.constant 123 : i32
    %415 = tpu.dynamic_rotate %358 by %c123_i32_197 dim 1 : vector<32x128xf32>, i32 -> vector<32x128xf32>
    %416 = vector.broadcast %210 : vector<1x128xf32> to vector<32x128xf32>
    %417 = arith.mulf %415, %416 : vector<32x128xf32>
    %cst_198 = arith.constant dense<0.000000e+00> : vector<32x128xf32>
    %418 = tpu.matmul %414, %417, %cst_198 {dimension_numbers = #tpu.dot_dimension_numbers<[1], [0], [0], [1], [0, 0, 1, 1], [], []>} : vector<32x32xf32>, vector<32x128xf32>, vector<32x128xf32> -> vector<32x128xf32>
    %419 = arith.addf %412, %418 : vector<32x128xf32>
    %420 = vector.shape_cast %419 : vector<32x128xf32> to vector<1x32x128xf32>
    %cst_199 = arith.constant dense<0.000000e+00> : vector<1xf32>
    %421 = vector.multi_reduction <add>, %420, %cst_199 [1, 2] : vector<1x32x128xf32> to vector<1xf32>
    %422 = vector.shape_cast %421 : vector<1xf32> to vector<1x1x1xf32>
    %423 = vector.extract %422[0, 0, 0] : f32 from vector<1x1x1xf32>
    %424 = arith.mulf %419, %419 : vector<32x128xf32>
    %425 = vector.shape_cast %424 : vector<32x128xf32> to vector<1x32x128xf32>
    %cst_200 = arith.constant dense<0.000000e+00> : vector<1xf32>
    %426 = vector.multi_reduction <add>, %425, %cst_200 [1, 2] : vector<1x32x128xf32> to vector<1xf32>
    %427 = vector.shape_cast %426 : vector<1xf32> to vector<1x1x1xf32>
    %428 = vector.extract %427[0, 0, 0] : f32 from vector<1x1x1xf32>
    %cst_201 = arith.constant 5.120000e+02 : f32
    %429 = arith.divf %423, %cst_201 : f32
    %cst_202 = arith.constant 5.120000e+02 : f32
    %430 = arith.divf %428, %cst_202 : f32
    %431 = arith.mulf %429, %429 : f32
    %432 = arith.subf %430, %431 : f32
    %cst_203 = arith.constant 9.99999974E-6 : f32
    %433 = arith.addf %432, %cst_203 : f32
    %434 = math.rsqrt %433 : f32
    %435 = vector.broadcast %429 : f32 to vector<32x128xf32>
    %436 = arith.subf %419, %435 : vector<32x128xf32>
    %437 = vector.broadcast %434 : f32 to vector<32x128xf32>
    %438 = arith.mulf %436, %437 : vector<32x128xf32>
    %cst_204 = arith.constant 0.000000e+00 : f32
    %439 = vector.broadcast %cst_204 : f32 to vector<32x128xf32>
    %440 = arith.maximumf %438, %439 : vector<32x128xf32>
    %c0_205 = arith.constant 0 : index
    %c0_206 = arith.constant 0 : index
    %c0_207 = arith.constant 0 : index
    %441 = vector.load %arg6[%c0_205, %c0_206, %c0_207] : memref<1x32x128xf32, #tpu.memory_space<vmem>>, vector<1x32x128xf32>
    %442 = vector.shape_cast %441 : vector<1x32x128xf32> to vector<32x128xf32>
    %443 = vector.shape_cast %440 : vector<32x128xf32> to vector<1x32x128xf32>
    tpu.vector_store %arg6[%c0_205, %c0_206, %c0_207], %443 {strides = array<i32>} : memref<1x32x128xf32, #tpu.memory_space<vmem>>, vector<1x32x128xf32>,
    return
  }
  func.func @transform_0(%arg0: i32) -> (i32, i32, i32) {
    %c0_i32 = arith.constant 0 : i32
    %c0_i32_0 = arith.constant 0 : i32
    %c0_i32_1 = arith.constant 0 : i32
    return %arg0, %c0_i32, %c0_i32_0 : i32, i32, i32
  }
  func.func @transform_1(%arg0: i32) -> (i32, i32, i32) {
    %c0_i32 = arith.constant 0 : i32
    %c0_i32_0 = arith.constant 0 : i32
    %c0_i32_1 = arith.constant 0 : i32
    return %arg0, %c0_i32, %c0_i32_0 : i32, i32, i32
  }
  func.func @transform_2(%arg0: i32) -> (i32, i32, i32) {
    %c0_i32 = arith.constant 0 : i32
    %c0_i32_0 = arith.constant 0 : i32
    %c0_i32_1 = arith.constant 0 : i32
    %c0_i32_2 = arith.constant 0 : i32
    return %c0_i32, %c0_i32_0, %c0_i32_1 : i32, i32, i32
  }
  func.func @transform_3(%arg0: i32) -> (i32, i32, i32) {
    %c0_i32 = arith.constant 0 : i32
    %c0_i32_0 = arith.constant 0 : i32
    %c0_i32_1 = arith.constant 0 : i32
    %c0_i32_2 = arith.constant 0 : i32
    return %c0_i32, %c0_i32_0, %c0_i32_1 : i32, i32, i32
  }
  func.func @transform_4(%arg0: i32) -> (i32, i32, i32) {
    %c0_i32 = arith.constant 0 : i32
    %c0_i32_0 = arith.constant 0 : i32
    %c0_i32_1 = arith.constant 0 : i32
    %c0_i32_2 = arith.constant 0 : i32
    return %c0_i32, %c0_i32_0, %c0_i32_1 : i32, i32, i32
  }
  func.func @transform_5(%arg0: i32) -> (i32, i32, i32) {
    %c0_i32 = arith.constant 0 : i32
    %c0_i32_0 = arith.constant 0 : i32
    %c0_i32_1 = arith.constant 0 : i32
    return %arg0, %c0_i32, %c0_i32_0 : i32, i32, i32
  }
}

</mosaic_0001>

<llo_original>
// kernel: tpu_custom_call.1
$region0: #{tpu_custom_call.1}
  #allocation0 [shape = 'u32[]', space=smem, size = 0x4, offset = 0x4, fixed_abs, tag = 'smem constant byte address 0x4 - core index']
  #allocation1 [shape = 'u32[72,128]{1,0:T(1,128)}', space=vmem, size = 0x9000, scoped, tag = 'internal scratch']
  %s0 = inlined_call_operand.hbm [shape: f32[2,64,128], index: 0, kind: input, shape index: {}]
  %s1 = inlined_call_operand.vmem [shape: f32[2,4,128], index: 1, kind: input, shape index: {}]
  %s2 = inlined_call_operand.vmem [shape: f32[9,32,64], index: 2, kind: input, shape index: {}]
  %s3 = inlined_call_operand.vmem [shape: f32[9,32,4], index: 3, kind: input, shape index: {}]
  %s4 = inlined_call_operand.hbm [shape: f32[9,32,32], index: 4, kind: input, shape index: {}]
  %s5 = inlined_call_operand.hbm [shape: f32[2,32,128], index: 5, kind: output, shape index: {}]
  %s6 = sld [smem:[#allocation0]]
  $region61: #{tpu_custom_call.1} parent=0
    _
  %s8 = ssub.s32 1, %s6
  %s9 = scalar_select 0, %s8, %s6
  $region1: #{tpu_custom_call.1} parent=0
    #allocation2 [shape = 'u8[65536]{0}', space=vmem, size = 0x10000, scoped, tag = 'input window, operand 0']
    #allocation3 [shape = 's32[2]{0}', space=sflag, size = 0x8, scoped, tag = 'scoped memory for tpu_custom_call.1']
    #allocation4 [shape = 's32[2]{0}', space=sflag, size = 0x8, scoped, tag = 'scoped memory for tpu_custom_call.1']
    #allocation5 [shape = 'u8[147456]{0}', space=vmem, size = 0x24000, scoped, tag = 'input window, operand 4, single buffered']
    #allocation6 [shape = 's32[1]{0}', space=sflag, size = 0x4, scoped, tag = 'scoped memory for tpu_custom_call.1']
    #allocation7 [shape = 'u8[32768]{0}', space=vmem, size = 0x8000, scoped, tag = 'output window, operand 0']
    %10 = vsyncpa [#allocation3], 0
    %s11 = scalar_lea.sflag [#allocation3], 1
    %12 = vsyncpa %s11, 0
    %13 = vsyncpa [#allocation6], 0
    %14 = vsyncpa [#allocation4], 0
    %s15 = scalar_lea.sflag [#allocation4], 1
    %16 = vsyncpa %s15, 0
    loop: start=0, step=1, limit=4
    $region2: #{tpu_custom_call.1} parent=1 // loop_pre_header
      _
    $region3: #{tpu_custom_call.1} parent=1 // loop_header
      %s18 = sphi 0, %s22
      %p19 = scmp.ge.s32.totalorder %s18, 4
      %s28 = sphi 0, %s30
      %s31 = sphi 0, %s28
      %s32 = sphi 0, %s31
      %s48 = sphi 0, %s32
      %s54 = sphi 0, %s56
      %s57 = sphi 0, %s54
      %s58 = sphi 0, %s57
      %s74 = sphi 0, %s58
      %s78 = sphi 0, %s78
      %s80 = sphi 0, %s78
      %s81 = sphi 0, %s80
      %s95 = sphi 0, %s81
      %s99 = sphi 0, %s99
      %s101 = sphi 0, %s99
      %s102 = sphi 0, %s101
      %s116 = sphi 0, %s102
      %s120 = sphi 0, %s120
      %s122 = sphi 0, %s120
      %s123 = sphi 0, %s122
      %s137 = sphi 0, %s123
      %s143 = sphi 0, %s145
      %s146 = sphi 0, %s143
      %s147 = sphi 0, %s146
      %s163 = sphi 0, %s147
    $region4: #{tpu_custom_call.1} parent=1 // loop_header_branch
      %21 = sbr.rel (%p19) target = $region8
    $region5: #{tpu_custom_call.1} parent=1 // loop_body
      %s23 = ssub.s32 %s18, 1
      %s24 = ssub.s32 %s18, 2
      %s25 = sadd.s32 %s18, 1
      %s26 = ssub.s32 %s18, %s25
      %p27 = scmp.eq.s32.totalorder %s26, 0
      %s29 = sadd.s32 %s28, 1
      %s30 = scalar_select %p27, %s28, %s29
      %p33 = pneg %p27
      %p34 = scmp.eq.s32.totalorder %s18, 1
      %p35 = por %p33, %p34
      %p36 = scmp.ne.s32.totalorder %s28, %s31
      %p37 = scmp.eq.s32.totalorder %s18, 0
      %p38 = por %p36, %p37
      %p39 = scmp.ne.s32.totalorder %s28, %s31
      %p40 = scmp.eq.s32.totalorder %s23, 1
      %p41 = por %p39, %p40
      %p42 = scmp.ne.s32.totalorder %s31, %s32
      %p43 = scmp.eq.s32.totalorder %s23, 0
      %p44 = por %p42, %p43
      %p45 = scmp.ne.s32.totalorder %s31, %s32
      %p46 = scmp.eq.s32.totalorder %s24, 1
      %p47 = por %p45, %p46
      %p49 = scmp.ne.s32.totalorder %s32, %s48
      %p50 = scmp.eq.s32.totalorder %s24, 0
      %p51 = por %p49, %p50
      %s52 = ssub.s32 %s18, %s25
      %p53 = scmp.eq.s32.totalorder %s52, 0
      %s55 = sadd.s32 %s54, 1
      %s56 = scalar_select %p53, %s54, %s55
      %p59 = pneg %p53
      %p60 = scmp.eq.s32.totalorder %s18, 1
      %p61 = por %p59, %p60
      %p62 = scmp.ne.s32.totalorder %s54, %s57
      %p63 = scmp.eq.s32.totalorder %s18, 0
      %p64 = por %p62, %p63
      %p65 = scmp.ne.s32.totalorder %s54, %s57
      %p66 = scmp.eq.s32.totalorder %s23, 1
      %p67 = por %p65, %p66
      %p68 = scmp.ne.s32.totalorder %s57, %s58
      %p69 = scmp.eq.s32.totalorder %s23, 0
      %p70 = por %p68, %p69
      %p71 = scmp.ne.s32.totalorder %s57, %s58
      %p72 = scmp.eq.s32.totalorder %s24, 1
      %p73 = por %p71, %p72
      %p75 = scmp.ne.s32.totalorder %s58, %s74
      %p76 = scmp.eq.s32.totalorder %s24, 0
      %p77 = por %p75, %p76
      %s79 = sadd.s32 %s78, 1
      %p82 = scmp.eq.s32.totalorder %s18, 1
      %p83 = scmp.ne.s32.totalorder %s78, %s80
      %p84 = scmp.eq.s32.totalorder %s18, 0
      %p85 = por %p83, %p84
      %p86 = scmp.ne.s32.totalorder %s78, %s80
      %p87 = scmp.eq.s32.totalorder %s23, 1
      %p88 = por %p86, %p87
      %p89 = scmp.ne.s32.totalorder %s80, %s81
      %p90 = scmp.eq.s32.totalorder %s23, 0
      %p91 = por %p89, %p90
      %p92 = scmp.ne.s32.totalorder %s80, %s81
      %p93 = scmp.eq.s32.totalorder %s24, 1
      %p94 = por %p92, %p93
      %p96 = scmp.ne.s32.totalorder %s81, %s95
      %p97 = scmp.eq.s32.totalorder %s24, 0
      %p98 = por %p96, %p97
      %s100 = sadd.s32 %s99, 1
      %p103 = scmp.eq.s32.totalorder %s18, 1
      %p104 = scmp.ne.s32.totalorder %s99, %s101
      %p105 = scmp.eq.s32.totalorder %s18, 0
      %p106 = por %p104, %p105
      %p107 = scmp.ne.s32.totalorder %s99, %s101
      %p108 = scmp.eq.s32.totalorder %s23, 1
      %p109 = por %p107, %p108
      %p110 = scmp.ne.s32.totalorder %s101, %s102
      %p111 = scmp.eq.s32.totalorder %s23, 0
      %p112 = por %p110, %p111
      %p113 = scmp.ne.s32.totalorder %s101, %s102
      %p114 = scmp.eq.s32.totalorder %s24, 1
      %p115 = por %p113, %p114
      %p117 = scmp.ne.s32.totalorder %s102, %s116
      %p118 = scmp.eq.s32.totalorder %s24, 0
      %p119 = por %p117, %p118
      %s121 = sadd.s32 %s120, 1
      %p124 = scmp.eq.s32.totalorder %s18, 1
      %p125 = scmp.ne.s32.totalorder %s120, %s122
      %p126 = scmp.eq.s32.totalorder %s18, 0
      %p127 = por %p125, %p126
      %p128 = scmp.ne.s32.totalorder %s120, %s122
      %p129 = scmp.eq.s32.totalorder %s23, 1
      %p130 = por %p128, %p129
      %p131 = scmp.ne.s32.totalorder %s122, %s123
      %p132 = scmp.eq.s32.totalorder %s23, 0
      %p133 = por %p131, %p132
      %p134 = scmp.ne.s32.totalorder %s122, %s123
      %p135 = scmp.eq.s32.totalorder %s24, 1
      %p136 = por %p134, %p135
      %p138 = scmp.ne.s32.totalorder %s123, %s137
      %p139 = scmp.eq.s32.totalorder %s24, 0
      %p140 = por %p138, %p139
      %s141 = ssub.s32 %s18, %s25
      %p142 = scmp.eq.s32.totalorder %s141, 0
      %s144 = sadd.s32 %s143, 1
      %s145 = scalar_select %p142, %s143, %s144
      %p148 = pneg %p142
      %p149 = scmp.eq.s32.totalorder %s18, 1
      %p150 = por %p148, %p149
      %p151 = scmp.ne.s32.totalorder %s143, %s146
      %p152 = scmp.eq.s32.totalorder %s18, 0
      %p153 = por %p151, %p152
      %p154 = scmp.ne.s32.totalorder %s143, %s146
      %p155 = scmp.eq.s32.totalorder %s23, 1
      %p156 = por %p154, %p155
      %p157 = scmp.ne.s32.totalorder %s146, %s147
      %p158 = scmp.eq.s32.totalorder %s23, 0
      %p159 = por %p157, %p158
      %p160 = scmp.ne.s32.totalorder %s146, %s147
      %p161 = scmp.eq.s32.totalorder %s24, 1
      %p162 = por %p160, %p161
      %p164 = scmp.ne.s32.totalorder %s147, %s163
      %p165 = scmp.eq.s32.totalorder %s24, 0
      %p166 = por %p164, %p165
      %p167 = scmp.le.s32.totalorder 1, %s18
      %p168 = scmp.lt.s32.totalorder %s18, 3
      %p169 = pnand %p167, %p168
      %p170 = pneg %p169
      // Predicated region
      $region9: #{tpu_custom_call.1} parent=5 // pred_check
        _
      $region10: #{tpu_custom_call.1} parent=5 // pred_check_branch
        %172 = sbr.rel (%p169) target = $region12
      $region11: #{tpu_custom_call.1} parent=5 // pred_region
        %s173 = ssub.s32 %s18, 1
        // Predicated region
        $region13: #{tpu_custom_call.1} parent=11 // pred_check
          %p174 = pneg %p91
        $region14: #{tpu_custom_call.1} parent=11 // pred_check_branch
          %176 = sbr.rel (%p174) target = $region16
        $region15: #{tpu_custom_call.1} parent=11 // pred_region
          _
        $region16: #{tpu_custom_call.1} parent=11 // pred_fallthru
          _
        // Predicated region
        $region17: #{tpu_custom_call.1} parent=11 // pred_check
          %p177 = pneg %p112
        $region18: #{tpu_custom_call.1} parent=11 // pred_check_branch
          %179 = sbr.rel (%p177) target = $region20
        $region19: #{tpu_custom_call.1} parent=11 // pred_region
          _
        $region20: #{tpu_custom_call.1} parent=11 // pred_fallthru
          _
        // Predicated region
        $region21: #{tpu_custom_call.1} parent=11 // pred_check
          %p180 = pneg %p133
        $region22: #{tpu_custom_call.1} parent=11 // pred_check_branch
          %182 = sbr.rel (%p180) target = $region24
        $region23: #{tpu_custom_call.1} parent=11 // pred_region
          %184 = vsyncadd [#allocation6], 0
          %s185 = sshll.u32 %s4, 4
          %s186 = int_to_ptr.hbm [resolvable:$true] %s185
          %s187 = sshll.u32 [#allocation5], 4
          %s188 = int_to_ptr.vmem [resolvable:$true] %s187
          %193 = dma.hbm_to_vmem [thread:$0]  %s186, 4608, %s188, [#allocation6], 128, 128, 8
        $region24: #{tpu_custom_call.1} parent=11 // pred_fallthru
          _
      $region12: #{tpu_custom_call.1} parent=5 // pred_fallthru
        _
      %p194 = scmp.lt.s32.totalorder %s18, 2
      // Predicated region
      $region25: #{tpu_custom_call.1} parent=5 // pred_check
        %p195 = pneg %p194
      $region26: #{tpu_custom_call.1} parent=5 // pred_check_branch
        %197 = sbr.rel (%p195) target = $region28
      $region27: #{tpu_custom_call.1} parent=5 // pred_region
        // Predicated region
        $region29: #{tpu_custom_call.1} parent=27 // pred_check
          %p198 = pneg %p38
        $region30: #{tpu_custom_call.1} parent=27 // pred_check_branch
          %200 = sbr.rel (%p198) target = $region32
        $region31: #{tpu_custom_call.1} parent=27 // pred_region
          %s201 = sand.u32 %s28, 1
          %s202 = scalar_lea.sflag [#allocation3], %s201
          %s203 = sand.u32 %s28, 1
          %s204 = smul.addr %s203, 64
          %s205 = scalar_lea.vmem [#allocation2], %s204
          %207 = vsyncadd %s202, 0
          %s208 = smul.addr %s18, 8
          %s209 = smul.addr %s208, 8
          %s210 = scalar_lea.hbm %s0, %s209
          %s211 = sshll.u32 %s210, 4
          %s212 = int_to_ptr.hbm [resolvable:$true] %s211
          %s213 = sshll.u32 %s205, 4
          %s214 = int_to_ptr.vmem [resolvable:$true] %s213
          %219 = dma.hbm_to_vmem [thread:$0]  %s212, 1024, %s214, %s202, 128, 128, 8
        $region32: #{tpu_custom_call.1} parent=27 // pred_fallthru
          _
        // Predicated region
        $region33: #{tpu_custom_call.1} parent=27 // pred_check
          %p220 = pneg %p64
        $region34: #{tpu_custom_call.1} parent=27 // pred_check_branch
          %222 = sbr.rel (%p220) target = $region36
        $region35: #{tpu_custom_call.1} parent=27 // pred_region
          %p223 = scmp.lt.s32.totalorder %s18, 1
          %s224 = scalar_select %p223, %s18, 1
          %s225 = smul.addr %s224, 4
          %s226 = scalar_lea.vmem %s1, %s225
        $region36: #{tpu_custom_call.1} parent=27 // pred_fallthru
          _
      $region28: #{tpu_custom_call.1} parent=5 // pred_fallthru
        _
      %p227 = scmp.le.s32.totalorder 1, %s18
      %p228 = scmp.lt.s32.totalorder %s18, 3
      %p229 = pnand %p227, %p228
      %p230 = pneg %p229
      // Predicated region
      $region37: #{tpu_custom_call.1} parent=5 // pred_check
        _
      $region38: #{tpu_custom_call.1} parent=5 // pred_check_branch
        %232 = sbr.rel (%p229) target = $region40
      $region39: #{tpu_custom_call.1} parent=5 // pred_region
        %s233 = ssub.s32 %s18, 1
        %s234 = sand.u32 %s31, 1
        %s235 = scalar_lea.sflag [#allocation3], %s234
        %s236 = sand.u32 %s31, 1
        %s237 = smul.addr %s236, 64
        %s238 = scalar_lea.vmem [#allocation2], %s237
        // Predicated region
        $region41: #{tpu_custom_call.1} parent=39 // pred_check
          %p239 = pneg %p44
        $region42: #{tpu_custom_call.1} parent=39 // pred_check_branch
          %241 = sbr.rel (%p239) target = $region44
        $region43: #{tpu_custom_call.1} parent=39 // pred_region
          %243 = dma.done %s235, 1024
        $region44: #{tpu_custom_call.1} parent=39 // pred_fallthru
          _
        // Predicated region
        $region45: #{tpu_custom_call.1} parent=39 // pred_check
          %p244 = pneg %p133
        $region46: #{tpu_custom_call.1} parent=39 // pred_check_branch
          %246 = sbr.rel (%p244) target = $region48
        $region47: #{tpu_custom_call.1} parent=39 // pred_region
          %248 = dma.done [#allocation6], 4608
        $region48: #{tpu_custom_call.1} parent=39 // pred_fallthru
          _
        %s249 = sand.u32 %s31, 1
        %s250 = scalar_lea.sflag [#allocation3], %s249
        %s251 = sand.u32 %s31, 1
        %s252 = smul.addr %s251, 64
        %s253 = scalar_lea.vmem [#allocation2], %s252
        %p254 = pneg %p44
        %p255 = pneg %p41
        %p256 = scmp.lt.s32.totalorder %s23, 1
        %s257 = scalar_select %p256, %s23, 1
        %s258 = smul.addr %s257, 4
        %s259 = scalar_lea.vmem %s1, %s258
        %p260 = pneg %p70
        %p261 = pneg %p67
        %p262 = pneg %p91
        %p263 = pneg %p88
        %p264 = pneg %p112
        %p265 = pneg %p109
        %p266 = pneg %p133
        %p267 = pneg %p130
        %p268 = pneg %p159
        %p269 = pneg %p156
        %s270 = sand.u32 %s146, 1
        %s271 = scalar_lea.sflag [#allocation4], %s270
        %s272 = sand.u32 %s146, 1
        %s273 = smul.addr %s272, 32
        %s274 = scalar_lea.vmem [#allocation7], %s273
        %p275 = scmp.lt.s32.totalorder %s23, 1
        %s276 = scalar_select %p275, %s23, 1
        %s277 = smul.addr %s276, 4
        %s278 = scalar_lea.vmem %s1, %s277
        %v279 = vlaneseq
        %v280 = vand.u32 %v279, 127
        %v281 = vcvt.s32.f32 %v280
        %v282 = vadd.f32 %v281, 0.5
        %v283 = vmul.f32 %v282, 0.25
        %v284 = vfloor.f32 %v283
        %v285 = vcvt.f32.s32.to.zero.pseudo %v284
        %v286 = vmul.u32 %v285, 4
        %v287 = vsub.s32 %v280, %v286
        %vm288 = vcmp.lt.s32.totalorder %v280, 16
        %v289 = vadd.s32 %v285, 4294967295
        %vm290 = vcmp.ge.s32.totalorder %v289, 0
        %vm291 = vcmp.lt.s32.totalorder %v289, 4
        %vm292 = vmand %vm290, %vm291
        %v293 = vadd.s32 %v287, 4294967295
        %vm294 = vcmp.ge.s32.totalorder %v293, 0
        %vm295 = vmand %vm292, %vm294
        %vm296 = vcmp.lt.s32.totalorder %v293, 4
        %vm297 = vmand %vm295, %vm296
        %vm298 = vmand %vm297, %vm288
        %v299 = vsel %vm298, 1, 0
        %v300 = vcvt.s32.f32 %v299
        %vm301 = vcmp.ge.s32.totalorder %v287, 0
        %vm302 = vmand %vm292, %vm301
        %vm303 = vcmp.lt.s32.totalorder %v287, 4
        %vm304 = vmand %vm302, %vm303
        %vm305 = vmand %vm304, %vm288
        %v306 = vsel %vm305, 1, 0
        %v307 = vcvt.s32.f32 %v306
        %v308 = vadd.s32 %v287, 1
        %vm309 = vcmp.ge.s32.totalorder %v308, 0
        %vm310 = vmand %vm292, %vm309
        %vm311 = vcmp.lt.s32.totalorder %v308, 4
        %vm312 = vmand %vm310, %vm311
        %vm313 = vmand %vm312, %vm288
        %v314 = vsel %vm313, 1, 0
        %v315 = vcvt.s32.f32 %v314
        %vm316 = vcmp.ge.s32.totalorder %v285, 0
        %vm317 = vcmp.lt.s32.totalorder %v285, 4
        %vm318 = vmand %vm316, %vm317
        %vm319 = vmand %vm318, %vm294
        %vm320 = vmand %vm319, %vm296
        %vm321 = vmand %vm320, %vm288
        %v322 = vsel %vm321, 1, 0
        %v323 = vcvt.s32.f32 %v322
        %vm324 = vmand %vm318, %vm301
        %vm325 = vmand %vm324, %vm303
        %vm326 = vmand %vm325, %vm288
        %v327 = vsel %vm326, 1, 0
        %v328 = vcvt.s32.f32 %v327
        %vm329 = vmand %vm318, %vm309
        %vm330 = vmand %vm329, %vm311
        %vm331 = vmand %vm330, %vm288
        %v332 = vsel %vm331, 1, 0
        %v333 = vcvt.s32.f32 %v332
        %v334 = vadd.s32 %v285, 1
        %vm335 = vcmp.ge.s32.totalorder %v334, 0
        %vm336 = vcmp.lt.s32.totalorder %v334, 4
        %vm337 = vmand %vm335, %vm336
        %vm338 = vmand %vm337, %vm294
        %vm339 = vmand %vm338, %vm296
        %vm340 = vmand %vm339, %vm288
        %v341 = vsel %vm340, 1, 0
        %v342 = vcvt.s32.f32 %v341
        %vm343 = vmand %vm337, %vm301
        %vm344 = vmand %vm343, %vm303
        %vm345 = vmand %vm344, %vm288
        %v346 = vsel %vm345, 1, 0
        %v347 = vcvt.s32.f32 %v346
        %vm348 = vmand %vm337, %vm309
        %vm349 = vmand %vm348, %vm311
        %vm350 = vmand %vm349, %vm288
        %v351 = vsel %vm350, 1, 0
        %v352 = vcvt.s32.f32 %v351
        %v353 = vld [vmem:[%s238] sm:$0xff]
        %v354 = vld [vmem:[%s238 + $0x8] sm:$0xff]
        %v355 = vld [vmem:[%s238 + $0x10] sm:$0xff]
        %v356 = vld [vmem:[%s238 + $0x18] sm:$0xff]
        %v357 = vld [vmem:[%s238 + $0x20] sm:$0xff]
        %v358 = vld [vmem:[%s238 + $0x28] sm:$0xff]
        %v359 = vld [vmem:[%s238 + $0x30] sm:$0xff]
        %v360 = vld [vmem:[%s238 + $0x38] sm:$0xff]
        %v361 = vld [vmem:[%s278] sm:$0xf]
        %v362 = vld [vmem:[%s2] sm:$0xff]
        %v363 = vld [vmem:[%s2 + $0x8] sm:$0xff]
        %v364 = vld [vmem:[%s2 + $0x10] sm:$0xff]
        %v365 = vld [vmem:[%s2 + $0x18] sm:$0xff]
        %366 = vrot.lane.b32.xlu0 %v353, 5
        %v367 = vpop.permute.xlu0 %366
        %368 = vrot.lane.b32.xlu0 %v354, 5
        %v369 = vpop.permute.xlu0 %368
        %370 = vrot.lane.b32.xlu0 %v355, 5
        %v371 = vpop.permute.xlu0 %370
        %372 = vrot.lane.b32.xlu0 %v356, 5
        %v373 = vpop.permute.xlu0 %372
        %374 = vrot.lane.b32.xlu0 %v357, 5
        %v375 = vpop.permute.xlu0 %374
        %376 = vrot.lane.b32.xlu0 %v358, 5
        %v377 = vpop.permute.xlu0 %376
        %378 = vrot.lane.b32.xlu0 %v359, 5
        %v379 = vpop.permute.xlu0 %378
        %380 = vrot.lane.b32.xlu0 %v360, 5
        %v381 = vpop.permute.xlu0 %380
        %v382 = vmul.f32 %v367, %v300
        %v383 = vmul.f32 %v369, %v300
        %v384 = vmul.f32 %v371, %v300
        %v385 = vmul.f32 %v373, %v300
        %v386 = vmul.f32 %v375, %v300
        %v387 = vmul.f32 %v377, %v300
        %v388 = vmul.f32 %v379, %v300
        %v389 = vmul.f32 %v381, %v300
        %v390 = vld [vmem:[%s3] sm:$0xff]
        %v391 = vld [vmem:[%s3 + $0x8] sm:$0xff]
        %v392 = vld [vmem:[%s3 + $0x10] sm:$0xff]
        %v393 = vld [vmem:[%s3 + $0x18] sm:$0xff]
        %394 = vrot.lane.b32.xlu0 %v361, 5
        %v395 = vpop.permute.xlu0 %394
        %v396 = vmul.f32 %v395, %v300
        %vm397 = vcmask 31744
        %v399 = vsel %vm397, %v390, 0
        %v402 = vsel %vm397, %v391, 0
        %v405 = vsel %vm397, %v392, 0
        %v408 = vsel %vm397, %v393, 0
        %vm410 = vcmask 1043456
        %v412 = vsel %vm410, %v396, 0
        %414 = vmatpush.msra.mxu0 0.0
        %415 = vmatpush.msra.mxu0 0.0
        %416 = vmatpush.msra.mxu0 0.0
        %417 = vmatpush.msra.mxu0 0.0
        %418 = vmatpush.msra.mxu0 0.0
        %419 = vmatpush.msra.mxu0 0.0
        %420 = vmatpush.msra.mxu0 0.0
        %421 = vmatpush.msra.mxu0 0.0
        %422 = vmatpush.msra.mxu0 0.0
        %423 = vmatpush.msra.mxu0 0.0
        %424 = vmatpush.msra.mxu0 0.0
        %425 = vmatpush.msra.mxu0 0.0
        %426 = vmatpush.msra.mxu0 0.0
        %427 = vmatpush.msra.mxu0 0.0
        %428 = vmatpush.msra.mxu0 0.0
        %429 = vmatpush.msra.mxu0 %v412
        %430 = vmatmul.f32.gmra.mxu0 %v399
        %v431 = vpop.f32.mrf.mxu0
        %v432 = vadd.f32 0.0, %v431
        %433 = vmatmul.f32.gmra.mxu0 %v402
        %v434 = vpop.f32.mrf.mxu0
        %v435 = vadd.f32 0.0, %v434
        %436 = vmatmul.f32.gmra.mxu0 %v405
        %v437 = vpop.f32.mrf.mxu0
        %v438 = vadd.f32 0.0, %v437
        %439 = vmatmul.f32.gmra.mxu0 %v408
        %v440 = vpop.f32.mrf.mxu0
        %v441 = vadd.f32 0.0, %v440
        %442 = vdwg.mxu0
        %vm443 = vcmask 523264
        %v445 = vsel %vm443, %v362, 0
        %v448 = vsel %vm443, %v363, 0
        %v451 = vsel %vm443, %v364, 0
        %v454 = vsel %vm443, %v365, 0
        %456 = vmatpush.msra.mxu0 0.0
        %457 = vmatpush.msra.mxu0 0.0
        %458 = vmatpush.msra.mxu0 0.0
        %459 = vmatpush.msra.mxu0 0.0
        %460 = vmatpush.msra.mxu0 0.0
        %461 = vmatpush.msra.mxu0 0.0
        %462 = vmatpush.msra.mxu0 0.0
        %463 = vmatpush.msra.mxu0 0.0
        %464 = vmatpush.msra.mxu0 %v389
        %465 = vmatpush.msra.mxu0 %v388
        %466 = vmatpush.msra.mxu0 %v387
        %467 = vmatpush.msra.mxu0 %v386
        %468 = vmatpush.msra.mxu0 %v385
        %469 = vmatpush.msra.mxu0 %v384
        %470 = vmatpush.msra.mxu0 %v383
        %471 = vmatpush.msra.mxu0 %v382
        %472 = vmatmul.f32.gmra.mxu0 %v445
        %v473 = vpop.f32.mrf.mxu0
        %v474 = vadd.f32 %v432, %v473
        %475 = vmatmul.f32.gmra.mxu0 %v448
        %v476 = vpop.f32.mrf.mxu0
        %v477 = vadd.f32 %v435, %v476
        %478 = vmatmul.f32.gmra.mxu0 %v451
        %v479 = vpop.f32.mrf.mxu0
        %v480 = vadd.f32 %v438, %v479
        %481 = vmatmul.f32.gmra.mxu0 %v454
        %v482 = vpop.f32.mrf.mxu0
        %v483 = vadd.f32 %v441, %v482
        %484 = vdwg.mxu0
        %s485 = scalar_lea.vmem %s2, 32
        %v486 = vld [vmem:[%s485] sm:$0xff]
        %v487 = vld [vmem:[%s485 + $0x8] sm:$0xff]
        %v488 = vld [vmem:[%s485 + $0x10] sm:$0xff]
        %v489 = vld [vmem:[%s485 + $0x18] sm:$0xff]
        %490 = vrot.lane.b32.xlu0 %v353, 4
        %v491 = vpop.permute.xlu0 %490
        %492 = vrot.lane.b32.xlu0 %v354, 4
        %v493 = vpop.permute.xlu0 %492
        %494 = vrot.lane.b32.xlu0 %v355, 4
        %v495 = vpop.permute.xlu0 %494
        %496 = vrot.lane.b32.xlu0 %v356, 4
        %v497 = vpop.permute.xlu0 %496
        %498 = vrot.lane.b32.xlu0 %v357, 4
        %v499 = vpop.permute.xlu0 %498
        %500 = vrot.lane.b32.xlu0 %v358, 4
        %v501 = vpop.permute.xlu0 %500
        %502 = vrot.lane.b32.xlu0 %v359, 4
        %v503 = vpop.permute.xlu0 %502
        %504 = vrot.lane.b32.xlu0 %v360, 4
        %v505 = vpop.permute.xlu0 %504
        %v506 = vmul.f32 %v491, %v307
        %v507 = vmul.f32 %v493, %v307
        %v508 = vmul.f32 %v495, %v307
        %v509 = vmul.f32 %v497, %v307
        %v510 = vmul.f32 %v499, %v307
        %v511 = vmul.f32 %v501, %v307
        %v512 = vmul.f32 %v503, %v307
        %v513 = vmul.f32 %v505, %v307
        %v515 = vsel %vm443, %v486, 0
        %v518 = vsel %vm443, %v487, 0
        %v521 = vsel %vm443, %v488, 0
        %v524 = vsel %vm443, %v489, 0
        %526 = vmatpush.msra.mxu0 0.0
        %527 = vmatpush.msra.mxu0 0.0
        %528 = vmatpush.msra.mxu0 0.0
        %529 = vmatpush.msra.mxu0 0.0
        %530 = vmatpush.msra.mxu0 0.0
        %531 = vmatpush.msra.mxu0 0.0
        %532 = vmatpush.msra.mxu0 0.0
        %533 = vmatpush.msra.mxu0 0.0
        %534 = vmatpush.msra.mxu0 %v513
        %535 = vmatpush.msra.mxu0 %v512
        %536 = vmatpush.msra.mxu0 %v511
        %537 = vmatpush.msra.mxu0 %v510
        %538 = vmatpush.msra.mxu0 %v509
        %539 = vmatpush.msra.mxu0 %v508
        %540 = vmatpush.msra.mxu0 %v507
        %541 = vmatpush.msra.mxu0 %v506
        %542 = vmatmul.f32.gmra.mxu0 %v515
        %v543 = vpop.f32.mrf.mxu0
        %v544 = vadd.f32 0.0, %v543
        %545 = vmatmul.f32.gmra.mxu0 %v518
        %v546 = vpop.f32.mrf.mxu0
        %v547 = vadd.f32 0.0, %v546
        %548 = vmatmul.f32.gmra.mxu0 %v521
        %v549 = vpop.f32.mrf.mxu0
        %v550 = vadd.f32 0.0, %v549
        %551 = vmatmul.f32.gmra.mxu0 %v524
        %v552 = vpop.f32.mrf.mxu0
        %v553 = vadd.f32 0.0, %v552
        %554 = vdwg.mxu0
        %v555 = vadd.f32 %v474, %v544
        %v556 = vadd.f32 %v477, %v547
        %v557 = vadd.f32 %v480, %v550
        %v558 = vadd.f32 %v483, %v553
        %s559 = scalar_lea.vmem %s3, 32
        %v560 = vld [vmem:[%s559] sm:$0xff]
        %v561 = vld [vmem:[%s559 + $0x8] sm:$0xff]
        %v562 = vld [vmem:[%s559 + $0x10] sm:$0xff]
        %v563 = vld [vmem:[%s559 + $0x18] sm:$0xff]
        %564 = vrot.lane.b32.xlu0 %v361, 4
        %v565 = vpop.permute.xlu0 %564
        %v566 = vmul.f32 %v565, %v307
        %v568 = vsel %vm397, %v560, 0
        %v571 = vsel %vm397, %v561, 0
        %v574 = vsel %vm397, %v562, 0
        %v577 = vsel %vm397, %v563, 0
        %v580 = vsel %vm410, %v566, 0
        %582 = vmatpush.msra.mxu0 0.0
        %583 = vmatpush.msra.mxu0 0.0
        %584 = vmatpush.msra.mxu0 0.0
        %585 = vmatpush.msra.mxu0 0.0
        %586 = vmatpush.msra.mxu0 0.0
        %587 = vmatpush.msra.mxu0 0.0
        %588 = vmatpush.msra.mxu0 0.0
        %589 = vmatpush.msra.mxu0 0.0
        %590 = vmatpush.msra.mxu0 0.0
        %591 = vmatpush.msra.mxu0 0.0
        %592 = vmatpush.msra.mxu0 0.0
        %593 = vmatpush.msra.mxu0 0.0
        %594 = vmatpush.msra.mxu0 0.0
        %595 = vmatpush.msra.mxu0 0.0
        %596 = vmatpush.msra.mxu0 0.0
        %597 = vmatpush.msra.mxu0 %v580
        %598 = vmatmul.f32.gmra.mxu0 %v568
        %v599 = vpop.f32.mrf.mxu0
        %v600 = vadd.f32 0.0, %v599
        %601 = vmatmul.f32.gmra.mxu0 %v571
        %v602 = vpop.f32.mrf.mxu0
        %v603 = vadd.f32 0.0, %v602
        %604 = vmatmul.f32.gmra.mxu0 %v574
        %v605 = vpop.f32.mrf.mxu0
        %v606 = vadd.f32 0.0, %v605
        %607 = vmatmul.f32.gmra.mxu0 %v577
        %v608 = vpop.f32.mrf.mxu0
        %v609 = vadd.f32 0.0, %v608
        %610 = vdwg.mxu0
        %v611 = vadd.f32 %v555, %v600
        %v612 = vadd.f32 %v556, %v603
        %v613 = vadd.f32 %v557, %v606
        %v614 = vadd.f32 %v558, %v609
        %s615 = scalar_lea.vmem %s2, 64
        %v616 = vld [vmem:[%s615] sm:$0xff]
        %v617 = vld [vmem:[%s615 + $0x8] sm:$0xff]
        %v618 = vld [vmem:[%s615 + $0x10] sm:$0xff]
        %v619 = vld [vmem:[%s615 + $0x18] sm:$0xff]
        %620 = vrot.lane.b32.xlu0 %v353, 3
        %v621 = vpop.permute.xlu0 %620
        %622 = vrot.lane.b32.xlu0 %v354, 3
        %v623 = vpop.permute.xlu0 %622
        %624 = vrot.lane.b32.xlu0 %v355, 3
        %v625 = vpop.permute.xlu0 %624
        %626 = vrot.lane.b32.xlu0 %v356, 3
        %v627 = vpop.permute.xlu0 %626
        %628 = vrot.lane.b32.xlu0 %v357, 3
        %v629 = vpop.permute.xlu0 %628
        %630 = vrot.lane.b32.xlu0 %v358, 3
        %v631 = vpop.permute.xlu0 %630
        %632 = vrot.lane.b32.xlu0 %v359, 3
        %v633 = vpop.permute.xlu0 %632
        %634 = vrot.lane.b32.xlu0 %v360, 3
        %v635 = vpop.permute.xlu0 %634
        %v636 = vmul.f32 %v621, %v315
        %v637 = vmul.f32 %v623, %v315
        %v638 = vmul.f32 %v625, %v315
        %v639 = vmul.f32 %v627, %v315
        %v640 = vmul.f32 %v629, %v315
        %v641 = vmul.f32 %v631, %v315
        %v642 = vmul.f32 %v633, %v315
        %v643 = vmul.f32 %v635, %v315
        %v645 = vsel %vm443, %v616, 0
        %v648 = vsel %vm443, %v617, 0
        %v651 = vsel %vm443, %v618, 0
        %v654 = vsel %vm443, %v619, 0
        %656 = vmatpush.msra.mxu0 0.0
        %657 = vmatpush.msra.mxu0 0.0
        %658 = vmatpush.msra.mxu0 0.0
        %659 = vmatpush.msra.mxu0 0.0
        %660 = vmatpush.msra.mxu0 0.0
        %661 = vmatpush.msra.mxu0 0.0
        %662 = vmatpush.msra.mxu0 0.0
        %663 = vmatpush.msra.mxu0 0.0
        %664 = vmatpush.msra.mxu0 %v643
        %665 = vmatpush.msra.mxu0 %v642
        %666 = vmatpush.msra.mxu0 %v641
        %667 = vmatpush.msra.mxu0 %v640
        %668 = vmatpush.msra.mxu0 %v639
        %669 = vmatpush.msra.mxu0 %v638
        %670 = vmatpush.msra.mxu0 %v637
        %671 = vmatpush.msra.mxu0 %v636
        %672 = vmatmul.f32.gmra.mxu0 %v645
        %v673 = vpop.f32.mrf.mxu0
        %v674 = vadd.f32 0.0, %v673
        %675 = vmatmul.f32.gmra.mxu0 %v648
        %v676 = vpop.f32.mrf.mxu0
        %v677 = vadd.f32 0.0, %v676
        %678 = vmatmul.f32.gmra.mxu0 %v651
        %v679 = vpop.f32.mrf.mxu0
        %v680 = vadd.f32 0.0, %v679
        %681 = vmatmul.f32.gmra.mxu0 %v654
        %v682 = vpop.f32.mrf.mxu0
        %v683 = vadd.f32 0.0, %v682
        %684 = vdwg.mxu0
        %v685 = vadd.f32 %v611, %v674
        %v686 = vadd.f32 %v612, %v677
        %v687 = vadd.f32 %v613, %v680
        %v688 = vadd.f32 %v614, %v683
        %s689 = scalar_lea.vmem %s3, 64
        %v690 = vld [vmem:[%s689] sm:$0xff]
        %v691 = vld [vmem:[%s689 + $0x8] sm:$0xff]
        %v692 = vld [vmem:[%s689 + $0x10] sm:$0xff]
        %v693 = vld [vmem:[%s689 + $0x18] sm:$0xff]
        %694 = vrot.lane.b32.xlu0 %v361, 3
        %v695 = vpop.permute.xlu0 %694
        %v696 = vmul.f32 %v695, %v315
        %v698 = vsel %vm397, %v690, 0
        %v701 = vsel %vm397, %v691, 0
        %v704 = vsel %vm397, %v692, 0
        %v707 = vsel %vm397, %v693, 0
        %v710 = vsel %vm410, %v696, 0
        %712 = vmatpush.msra.mxu0 0.0
        %713 = vmatpush.msra.mxu0 0.0
        %714 = vmatpush.msra.mxu0 0.0
        %715 = vmatpush.msra.mxu0 0.0
        %716 = vmatpush.msra.mxu0 0.0
        %717 = vmatpush.msra.mxu0 0.0
        %718 = vmatpush.msra.mxu0 0.0
        %719 = vmatpush.msra.mxu0 0.0
        %720 = vmatpush.msra.mxu0 0.0
        %721 = vmatpush.msra.mxu0 0.0
        %722 = vmatpush.msra.mxu0 0.0
        %723 = vmatpush.msra.mxu0 0.0
        %724 = vmatpush.msra.mxu0 0.0
        %725 = vmatpush.msra.mxu0 0.0
        %726 = vmatpush.msra.mxu0 0.0
        %727 = vmatpush.msra.mxu0 %v710
        %728 = vmatmul.f32.gmra.mxu0 %v698
        %v729 = vpop.f32.mrf.mxu0
        %v730 = vadd.f32 0.0, %v729
        %731 = vmatmul.f32.gmra.mxu0 %v701
        %v732 = vpop.f32.mrf.mxu0
        %v733 = vadd.f32 0.0, %v732
        %734 = vmatmul.f32.gmra.mxu0 %v704
        %v735 = vpop.f32.mrf.mxu0
        %v736 = vadd.f32 0.0, %v735
        %737 = vmatmul.f32.gmra.mxu0 %v707
        %v738 = vpop.f32.mrf.mxu0
        %v739 = vadd.f32 0.0, %v738
        %740 = vdwg.mxu0
        %v741 = vadd.f32 %v685, %v730
        %v742 = vadd.f32 %v686, %v733
        %v743 = vadd.f32 %v687, %v736
        %v744 = vadd.f32 %v688, %v739
        %s745 = scalar_lea.vmem %s2, 96
        %v746 = vld [vmem:[%s745] sm:$0xff]
        %v747 = vld [vmem:[%s745 + $0x8] sm:$0xff]
        %v748 = vld [vmem:[%s745 + $0x10] sm:$0xff]
        %v749 = vld [vmem:[%s745 + $0x18] sm:$0xff]
        %750 = vrot.lane.b32.xlu0 %v353, 1
        %v751 = vpop.permute.xlu0 %750
        %752 = vrot.lane.b32.xlu0 %v354, 1
        %v753 = vpop.permute.xlu0 %752
        %754 = vrot.lane.b32.xlu0 %v355, 1
        %v755 = vpop.permute.xlu0 %754
        %756 = vrot.lane.b32.xlu0 %v356, 1
        %v757 = vpop.permute.xlu0 %756
        %758 = vrot.lane.b32.xlu0 %v357, 1
        %v759 = vpop.permute.xlu0 %758
        %760 = vrot.lane.b32.xlu0 %v358, 1
        %v761 = vpop.permute.xlu0 %760
        %762 = vrot.lane.b32.xlu0 %v359, 1
        %v763 = vpop.permute.xlu0 %762
        %764 = vrot.lane.b32.xlu0 %v360, 1
        %v765 = vpop.permute.xlu0 %764
        %v766 = vmul.f32 %v751, %v323
        %v767 = vmul.f32 %v753, %v323
        %v768 = vmul.f32 %v755, %v323
        %v769 = vmul.f32 %v757, %v323
        %v770 = vmul.f32 %v759, %v323
        %v771 = vmul.f32 %v761, %v323
        %v772 = vmul.f32 %v763, %v323
        %v773 = vmul.f32 %v765, %v323
        %v775 = vsel %vm443, %v746, 0
        %v778 = vsel %vm443, %v747, 0
        %v781 = vsel %vm443, %v748, 0
        %v784 = vsel %vm443, %v749, 0
        %786 = vmatpush.msra.mxu0 0.0
        %787 = vmatpush.msra.mxu0 0.0
        %788 = vmatpush.msra.mxu0 0.0
        %789 = vmatpush.msra.mxu0 0.0
        %790 = vmatpush.msra.mxu0 0.0
        %791 = vmatpush.msra.mxu0 0.0
        %792 = vmatpush.msra.mxu0 0.0
        %793 = vmatpush.msra.mxu0 0.0
        %794 = vmatpush.msra.mxu0 %v773
        %795 = vmatpush.msra.mxu0 %v772
        %796 = vmatpush.msra.mxu0 %v771
        %797 = vmatpush.msra.mxu0 %v770
        %798 = vmatpush.msra.mxu0 %v769
        %799 = vmatpush.msra.mxu0 %v768
        %800 = vmatpush.msra.mxu0 %v767
        %801 = vmatpush.msra.mxu0 %v766
        %802 = vmatmul.f32.gmra.mxu0 %v775
        %v803 = vpop.f32.mrf.mxu0
        %v804 = vadd.f32 0.0, %v803
        %805 = vmatmul.f32.gmra.mxu0 %v778
        %v806 = vpop.f32.mrf.mxu0
        %v807 = vadd.f32 0.0, %v806
        %808 = vmatmul.f32.gmra.mxu0 %v781
        %v809 = vpop.f32.mrf.mxu0
        %v810 = vadd.f32 0.0, %v809
        %811 = vmatmul.f32.gmra.mxu0 %v784
        %v812 = vpop.f32.mrf.mxu0
        %v813 = vadd.f32 0.0, %v812
        %814 = vdwg.mxu0
        %v815 = vadd.f32 %v741, %v804
        %v816 = vadd.f32 %v742, %v807
        %v817 = vadd.f32 %v743, %v810
        %v818 = vadd.f32 %v744, %v813
        %s819 = scalar_lea.vmem %s3, 96
        %v820 = vld [vmem:[%s819] sm:$0xff]
        %v821 = vld [vmem:[%s819 + $0x8] sm:$0xff]
        %v822 = vld [vmem:[%s819 + $0x10] sm:$0xff]
        %v823 = vld [vmem:[%s819 + $0x18] sm:$0xff]
        %824 = vrot.lane.b32.xlu0 %v361, 1
        %v825 = vpop.permute.xlu0 %824
        %v826 = vmul.f32 %v825, %v323
        %v828 = vsel %vm397, %v820, 0
        %v831 = vsel %vm397, %v821, 0
        %v834 = vsel %vm397, %v822, 0
        %v837 = vsel %vm397, %v823, 0
        %v840 = vsel %vm410, %v826, 0
        %842 = vmatpush.msra.mxu0 0.0
        %843 = vmatpush.msra.mxu0 0.0
        %844 = vmatpush.msra.mxu0 0.0
        %845 = vmatpush.msra.mxu0 0.0
        %846 = vmatpush.msra.mxu0 0.0
        %847 = vmatpush.msra.mxu0 0.0
        %848 = vmatpush.msra.mxu0 0.0
        %849 = vmatpush.msra.mxu0 0.0
        %850 = vmatpush.msra.mxu0 0.0
        %851 = vmatpush.msra.mxu0 0.0
        %852 = vmatpush.msra.mxu0 0.0
        %853 = vmatpush.msra.mxu0 0.0
        %854 = vmatpush.msra.mxu0 0.0
        %855 = vmatpush.msra.mxu0 0.0
        %856 = vmatpush.msra.mxu0 0.0
        %857 = vmatpush.msra.mxu0 %v840
        %858 = vmatmul.f32.gmra.mxu0 %v828
        %v859 = vpop.f32.mrf.mxu0
        %v860 = vadd.f32 0.0, %v859
        %861 = vmatmul.f32.gmra.mxu0 %v831
        %v862 = vpop.f32.mrf.mxu0
        %v863 = vadd.f32 0.0, %v862
        %864 = vmatmul.f32.gmra.mxu0 %v834
        %v865 = vpop.f32.mrf.mxu0
        %v866 = vadd.f32 0.0, %v865
        %867 = vmatmul.f32.gmra.mxu0 %v837
        %v868 = vpop.f32.mrf.mxu0
        %v869 = vadd.f32 0.0, %v868
        %870 = vdwg.mxu0
        %v871 = vadd.f32 %v815, %v860
        %v872 = vadd.f32 %v816, %v863
        %v873 = vadd.f32 %v817, %v866
        %v874 = vadd.f32 %v818, %v869
        %s875 = scalar_lea.vmem %s2, 128
        %v876 = vld [vmem:[%s875] sm:$0xff]
        %v877 = vld [vmem:[%s875 + $0x8] sm:$0xff]
        %v878 = vld [vmem:[%s875 + $0x10] sm:$0xff]
        %v879 = vld [vmem:[%s875 + $0x18] sm:$0xff]
        %v880 = vmul.f32 %v353, %v328
        %v881 = vmul.f32 %v354, %v328
        %v882 = vmul.f32 %v355, %v328
        %v883 = vmul.f32 %v356, %v328
        %v884 = vmul.f32 %v357, %v328
        %v885 = vmul.f32 %v358, %v328
        %v886 = vmul.f32 %v359, %v328
        %v887 = vmul.f32 %v360, %v328
        %v889 = vsel %vm443, %v876, 0
        %v892 = vsel %vm443, %v877, 0
        %v895 = vsel %vm443, %v878, 0
        %v898 = vsel %vm443, %v879, 0
        %900 = vmatpush.msra.mxu0 0.0
        %901 = vmatpush.msra.mxu0 0.0
        %902 = vmatpush.msra.mxu0 0.0
        %903 = vmatpush.msra.mxu0 0.0
        %904 = vmatpush.msra.mxu0 0.0
        %905 = vmatpush.msra.mxu0 0.0
        %906 = vmatpush.msra.mxu0 0.0
        %907 = vmatpush.msra.mxu0 0.0
        %908 = vmatpush.msra.mxu0 %v887
        %909 = vmatpush.msra.mxu0 %v886
        %910 = vmatpush.msra.mxu0 %v885
        %911 = vmatpush.msra.mxu0 %v884
        %912 = vmatpush.msra.mxu0 %v883
        %913 = vmatpush.msra.mxu0 %v882
        %914 = vmatpush.msra.mxu0 %v881
        %915 = vmatpush.msra.mxu0 %v880
        %916 = vmatmul.f32.gmra.mxu0 %v889
        %v917 = vpop.f32.mrf.mxu0
        %v918 = vadd.f32 0.0, %v917
        %919 = vmatmul.f32.gmra.mxu0 %v892
        %v920 = vpop.f32.mrf.mxu0
        %v921 = vadd.f32 0.0, %v920
        %922 = vmatmul.f32.gmra.mxu0 %v895
        %v923 = vpop.f32.mrf.mxu0
        %v924 = vadd.f32 0.0, %v923
        %925 = vmatmul.f32.gmra.mxu0 %v898
        %v926 = vpop.f32.mrf.mxu0
        %v927 = vadd.f32 0.0, %v926
        %928 = vdwg.mxu0
        %v929 = vadd.f32 %v871, %v918
        %v930 = vadd.f32 %v872, %v921
        %v931 = vadd.f32 %v873, %v924
        %v932 = vadd.f32 %v874, %v927
        %s933 = scalar_lea.vmem %s3, 128
        %v934 = vld [vmem:[%s933] sm:$0xff]
        %v935 = vld [vmem:[%s933 + $0x8] sm:$0xff]
        %v936 = vld [vmem:[%s933 + $0x10] sm:$0xff]
        %v937 = vld [vmem:[%s933 + $0x18] sm:$0xff]
        %v938 = vmul.f32 %v361, %v328
        %v940 = vsel %vm397, %v934, 0
        %v943 = vsel %vm397, %v935, 0
        %v946 = vsel %vm397, %v936, 0
        %v949 = vsel %vm397, %v937, 0
        %v952 = vsel %vm410, %v938, 0
        %954 = vmatpush.msra.mxu0 0.0
        %955 = vmatpush.msra.mxu0 0.0
        %956 = vmatpush.msra.mxu0 0.0
        %957 = vmatpush.msra.mxu0 0.0
        %958 = vmatpush.msra.mxu0 0.0
        %959 = vmatpush.msra.mxu0 0.0
        %960 = vmatpush.msra.mxu0 0.0
        %961 = vmatpush.msra.mxu0 0.0
        %962 = vmatpush.msra.mxu0 0.0
        %963 = vmatpush.msra.mxu0 0.0
        %964 = vmatpush.msra.mxu0 0.0
        %965 = vmatpush.msra.mxu0 0.0
        %966 = vmatpush.msra.mxu0 0.0
        %967 = vmatpush.msra.mxu0 0.0
        %968 = vmatpush.msra.mxu0 0.0
        %969 = vmatpush.msra.mxu0 %v952
        %970 = vmatmul.f32.gmra.mxu0 %v940
        %v971 = vpop.f32.mrf.mxu0
        %v972 = vadd.f32 0.0, %v971
        %973 = vmatmul.f32.gmra.mxu0 %v943
        %v974 = vpop.f32.mrf.mxu0
        %v975 = vadd.f32 0.0, %v974
        %976 = vmatmul.f32.gmra.mxu0 %v946
        %v977 = vpop.f32.mrf.mxu0
        %v978 = vadd.f32 0.0, %v977
        %979 = vmatmul.f32.gmra.mxu0 %v949
        %v980 = vpop.f32.mrf.mxu0
        %v981 = vadd.f32 0.0, %v980
        %982 = vdwg.mxu0
        %v983 = vadd.f32 %v929, %v972
        %v984 = vadd.f32 %v930, %v975
        %v985 = vadd.f32 %v931, %v978
        %v986 = vadd.f32 %v932, %v981
        %s987 = scalar_lea.vmem %s2, 160
        %v988 = vld [vmem:[%s987] sm:$0xff]
        %v989 = vld [vmem:[%s987 + $0x8] sm:$0xff]
        %v990 = vld [vmem:[%s987 + $0x10] sm:$0xff]
        %v991 = vld [vmem:[%s987 + $0x18] sm:$0xff]
        %992 = vrot.lane.b32.xlu0 %v353, 127
        %v993 = vpop.permute.xlu0 %992
        %994 = vrot.lane.b32.xlu0 %v354, 127
        %v995 = vpop.permute.xlu0 %994
        %996 = vrot.lane.b32.xlu0 %v355, 127
        %v997 = vpop.permute.xlu0 %996
        %998 = vrot.lane.b32.xlu0 %v356, 127
        %v999 = vpop.permute.xlu0 %998
        %1000 = vrot.lane.b32.xlu0 %v357, 127
        %v1001 = vpop.permute.xlu0 %1000
        %1002 = vrot.lane.b32.xlu0 %v358, 127
        %v1003 = vpop.permute.xlu0 %1002
        %1004 = vrot.lane.b32.xlu0 %v359, 127
        %v1005 = vpop.permute.xlu0 %1004
        %1006 = vrot.lane.b32.xlu0 %v360, 127
        %v1007 = vpop.permute.xlu0 %1006
        %v1008 = vmul.f32 %v993, %v333
        %v1009 = vmul.f32 %v995, %v333
        %v1010 = vmul.f32 %v997, %v333
        %v1011 = vmul.f32 %v999, %v333
        %v1012 = vmul.f32 %v1001, %v333
        %v1013 = vmul.f32 %v1003, %v333
        %v1014 = vmul.f32 %v1005, %v333
        %v1015 = vmul.f32 %v1007, %v333
        %v1017 = vsel %vm443, %v988, 0
        %v1020 = vsel %vm443, %v989, 0
        %v1023 = vsel %vm443, %v990, 0
        %v1026 = vsel %vm443, %v991, 0
        %1028 = vmatpush.msra.mxu0 0.0
        %1029 = vmatpush.msra.mxu0 0.0
        %1030 = vmatpush.msra.mxu0 0.0
        %1031 = vmatpush.msra.mxu0 0.0
        %1032 = vmatpush.msra.mxu0 0.0
        %1033 = vmatpush.msra.mxu0 0.0
        %1034 = vmatpush.msra.mxu0 0.0
        %1035 = vmatpush.msra.mxu0 0.0
        %1036 = vmatpush.msra.mxu0 %v1015
        %1037 = vmatpush.msra.mxu0 %v1014
        %1038 = vmatpush.msra.mxu0 %v1013
        %1039 = vmatpush.msra.mxu0 %v1012
        %1040 = vmatpush.msra.mxu0 %v1011
        %1041 = vmatpush.msra.mxu0 %v1010
        %1042 = vmatpush.msra.mxu0 %v1009
        %1043 = vmatpush.msra.mxu0 %v1008
        %1044 = vmatmul.f32.gmra.mxu0 %v1017
        %v1045 = vpop.f32.mrf.mxu0
        %v1046 = vadd.f32 0.0, %v1045
        %1047 = vmatmul.f32.gmra.mxu0 %v1020
        %v1048 = vpop.f32.mrf.mxu0
        %v1049 = vadd.f32 0.0, %v1048
        %1050 = vmatmul.f32.gmra.mxu0 %v1023
        %v1051 = vpop.f32.mrf.mxu0
        %v1052 = vadd.f32 0.0, %v1051
        %1053 = vmatmul.f32.gmra.mxu0 %v1026
        %v1054 = vpop.f32.mrf.mxu0
        %v1055 = vadd.f32 0.0, %v1054
        %1056 = vdwg.mxu0
        %v1057 = vadd.f32 %v983, %v1046
        %v1058 = vadd.f32 %v984, %v1049
        %v1059 = vadd.f32 %v985, %v1052
        %v1060 = vadd.f32 %v986, %v1055
        %s1061 = scalar_lea.vmem %s3, 160
        %v1062 = vld [vmem:[%s1061] sm:$0xff]
        %v1063 = vld [vmem:[%s1061 + $0x8] sm:$0xff]
        %v1064 = vld [vmem:[%s1061 + $0x10] sm:$0xff]
        %v1065 = vld [vmem:[%s1061 + $0x18] sm:$0xff]
        %1066 = vrot.lane.b32.xlu0 %v361, 127
        %v1067 = vpop.permute.xlu0 %1066
        %v1068 = vmul.f32 %v1067, %v333
        %v1070 = vsel %vm397, %v1062, 0
        %v1073 = vsel %vm397, %v1063, 0
        %v1076 = vsel %vm397, %v1064, 0
        %v1079 = vsel %vm397, %v1065, 0
        %v1082 = vsel %vm410, %v1068, 0
        %1084 = vmatpush.msra.mxu0 0.0
        %1085 = vmatpush.msra.mxu0 0.0
        %1086 = vmatpush.msra.mxu0 0.0
        %1087 = vmatpush.msra.mxu0 0.0
        %1088 = vmatpush.msra.mxu0 0.0
        %1089 = vmatpush.msra.mxu0 0.0
        %1090 = vmatpush.msra.mxu0 0.0
        %1091 = vmatpush.msra.mxu0 0.0
        %1092 = vmatpush.msra.mxu0 0.0
        %1093 = vmatpush.msra.mxu0 0.0
        %1094 = vmatpush.msra.mxu0 0.0
        %1095 = vmatpush.msra.mxu0 0.0
        %1096 = vmatpush.msra.mxu0 0.0
        %1097 = vmatpush.msra.mxu0 0.0
        %1098 = vmatpush.msra.mxu0 0.0
        %1099 = vmatpush.msra.mxu0 %v1082
        %1100 = vmatmul.f32.gmra.mxu0 %v1070
        %v1101 = vpop.f32.mrf.mxu0
        %v1102 = vadd.f32 0.0, %v1101
        %1103 = vmatmul.f32.gmra.mxu0 %v1073
        %v1104 = vpop.f32.mrf.mxu0
        %v1105 = vadd.f32 0.0, %v1104
        %1106 = vmatmul.f32.gmra.mxu0 %v1076
        %v1107 = vpop.f32.mrf.mxu0
        %v1108 = vadd.f32 0.0, %v1107
        %1109 = vmatmul.f32.gmra.mxu0 %v1079
        %v1110 = vpop.f32.mrf.mxu0
        %v1111 = vadd.f32 0.0, %v1110
        %1112 = vdwg.mxu0
        %v1113 = vadd.f32 %v1057, %v1102
        %v1114 = vadd.f32 %v1058, %v1105
        %v1115 = vadd.f32 %v1059, %v1108
        %v1116 = vadd.f32 %v1060, %v1111
        %s1117 = scalar_lea.vmem %s2, 192
        %v1118 = vld [vmem:[%s1117] sm:$0xff]
        %v1119 = vld [vmem:[%s1117 + $0x8] sm:$0xff]
        %v1120 = vld [vmem:[%s1117 + $0x10] sm:$0xff]
        %v1121 = vld [vmem:[%s1117 + $0x18] sm:$0xff]
        %1122 = vrot.lane.b32.xlu0 %v353, 125
        %v1123 = vpop.permute.xlu0 %1122
        %1124 = vrot.lane.b32.xlu0 %v354, 125
        %v1125 = vpop.permute.xlu0 %1124
        %1126 = vrot.lane.b32.xlu0 %v355, 125
        %v1127 = vpop.permute.xlu0 %1126
        %1128 = vrot.lane.b32.xlu0 %v356, 125
        %v1129 = vpop.permute.xlu0 %1128
        %1130 = vrot.lane.b32.xlu0 %v357, 125
        %v1131 = vpop.permute.xlu0 %1130
        %1132 = vrot.lane.b32.xlu0 %v358, 125
        %v1133 = vpop.permute.xlu0 %1132
        %1134 = vrot.lane.b32.xlu0 %v359, 125
        %v1135 = vpop.permute.xlu0 %1134
        %1136 = vrot.lane.b32.xlu0 %v360, 125
        %v1137 = vpop.permute.xlu0 %1136
        %v1138 = vmul.f32 %v1123, %v342
        %v1139 = vmul.f32 %v1125, %v342
        %v1140 = vmul.f32 %v1127, %v342
        %v1141 = vmul.f32 %v1129, %v342
        %v1142 = vmul.f32 %v1131, %v342
        %v1143 = vmul.f32 %v1133, %v342
        %v1144 = vmul.f32 %v1135, %v342
        %v1145 = vmul.f32 %v1137, %v342
        %v1147 = vsel %vm443, %v1118, 0
        %v1150 = vsel %vm443, %v1119, 0
        %v1153 = vsel %vm443, %v1120, 0
        %v1156 = vsel %vm443, %v1121, 0
        %1158 = vmatpush.msra.mxu0 0.0
        %1159 = vmatpush.msra.mxu0 0.0
        %1160 = vmatpush.msra.mxu0 0.0
        %1161 = vmatpush.msra.mxu0 0.0
        %1162 = vmatpush.msra.mxu0 0.0
        %1163 = vmatpush.msra.mxu0 0.0
        %1164 = vmatpush.msra.mxu0 0.0
        %1165 = vmatpush.msra.mxu0 0.0
        %1166 = vmatpush.msra.mxu0 %v1145
        %1167 = vmatpush.msra.mxu0 %v1144
        %1168 = vmatpush.msra.mxu0 %v1143
        %1169 = vmatpush.msra.mxu0 %v1142
        %1170 = vmatpush.msra.mxu0 %v1141
        %1171 = vmatpush.msra.mxu0 %v1140
        %1172 = vmatpush.msra.mxu0 %v1139
        %1173 = vmatpush.msra.mxu0 %v1138
        %1174 = vmatmul.f32.gmra.mxu0 %v1147
        %v1175 = vpop.f32.mrf.mxu0
        %v1176 = vadd.f32 0.0, %v1175
        %1177 = vmatmul.f32.gmra.mxu0 %v1150
        %v1178 = vpop.f32.mrf.mxu0
        %v1179 = vadd.f32 0.0, %v1178
        %1180 = vmatmul.f32.gmra.mxu0 %v1153
        %v1181 = vpop.f32.mrf.mxu0
        %v1182 = vadd.f32 0.0, %v1181
        %1183 = vmatmul.f32.gmra.mxu0 %v1156
        %v1184 = vpop.f32.mrf.mxu0
        %v1185 = vadd.f32 0.0, %v1184
        %1186 = vdwg.mxu0
        %v1187 = vadd.f32 %v1113, %v1176
        %v1188 = vadd.f32 %v1114, %v1179
        %v1189 = vadd.f32 %v1115, %v1182
        %v1190 = vadd.f32 %v1116, %v1185
        %s1191 = scalar_lea.vmem %s3, 192
        %v1192 = vld [vmem:[%s1191] sm:$0xff]
        %v1193 = vld [vmem:[%s1191 + $0x8] sm:$0xff]
        %v1194 = vld [vmem:[%s1191 + $0x10] sm:$0xff]
        %v1195 = vld [vmem:[%s1191 + $0x18] sm:$0xff]
        %1196 = vrot.lane.b32.xlu0 %v361, 125
        %v1197 = vpop.permute.xlu0 %1196
        %v1198 = vmul.f32 %v1197, %v342
        %v1200 = vsel %vm397, %v1192, 0
        %v1203 = vsel %vm397, %v1193, 0
        %v1206 = vsel %vm397, %v1194, 0
        %v1209 = vsel %vm397, %v1195, 0
        %v1212 = vsel %vm410, %v1198, 0
        %1214 = vmatpush.msra.mxu0 0.0
        %1215 = vmatpush.msra.mxu0 0.0
        %1216 = vmatpush.msra.mxu0 0.0
        %1217 = vmatpush.msra.mxu0 0.0
        %1218 = vmatpush.msra.mxu0 0.0
        %1219 = vmatpush.msra.mxu0 0.0
        %1220 = vmatpush.msra.mxu0 0.0
        %1221 = vmatpush.msra.mxu0 0.0
        %1222 = vmatpush.msra.mxu0 0.0
        %1223 = vmatpush.msra.mxu0 0.0
        %1224 = vmatpush.msra.mxu0 0.0
        %1225 = vmatpush.msra.mxu0 0.0
        %1226 = vmatpush.msra.mxu0 0.0
        %1227 = vmatpush.msra.mxu0 0.0
        %1228 = vmatpush.msra.mxu0 0.0
        %1229 = vmatpush.msra.mxu0 %v1212
        %1230 = vmatmul.f32.gmra.mxu0 %v1200
        %v1231 = vpop.f32.mrf.mxu0
        %v1232 = vadd.f32 0.0, %v1231
        %1233 = vmatmul.f32.gmra.mxu0 %v1203
        %v1234 = vpop.f32.mrf.mxu0
        %v1235 = vadd.f32 0.0, %v1234
        %1236 = vmatmul.f32.gmra.mxu0 %v1206
        %v1237 = vpop.f32.mrf.mxu0
        %v1238 = vadd.f32 0.0, %v1237
        %1239 = vmatmul.f32.gmra.mxu0 %v1209
        %v1240 = vpop.f32.mrf.mxu0
        %v1241 = vadd.f32 0.0, %v1240
        %1242 = vdwg.mxu0
        %v1243 = vadd.f32 %v1187, %v1232
        %v1244 = vadd.f32 %v1188, %v1235
        %v1245 = vadd.f32 %v1189, %v1238
        %v1246 = vadd.f32 %v1190, %v1241
        %s1247 = scalar_lea.vmem %s2, 224
        %v1248 = vld [vmem:[%s1247] sm:$0xff]
        %v1249 = vld [vmem:[%s1247 + $0x8] sm:$0xff]
        %v1250 = vld [vmem:[%s1247 + $0x10] sm:$0xff]
        %v1251 = vld [vmem:[%s1247 + $0x18] sm:$0xff]
        %1252 = vrot.lane.b32.xlu0 %v353, 124
        %v1253 = vpop.permute.xlu0 %1252
        %1254 = vrot.lane.b32.xlu0 %v354, 124
        %v1255 = vpop.permute.xlu0 %1254
        %1256 = vrot.lane.b32.xlu0 %v355, 124
        %v1257 = vpop.permute.xlu0 %1256
        %1258 = vrot.lane.b32.xlu0 %v356, 124
        %v1259 = vpop.permute.xlu0 %1258
        %1260 = vrot.lane.b32.xlu0 %v357, 124
        %v1261 = vpop.permute.xlu0 %1260
        %1262 = vrot.lane.b32.xlu0 %v358, 124
        %v1263 = vpop.permute.xlu0 %1262
        %1264 = vrot.lane.b32.xlu0 %v359, 124
        %v1265 = vpop.permute.xlu0 %1264
        %1266 = vrot.lane.b32.xlu0 %v360, 124
        %v1267 = vpop.permute.xlu0 %1266
        %v1268 = vmul.f32 %v1253, %v347
        %v1269 = vmul.f32 %v1255, %v347
        %v1270 = vmul.f32 %v1257, %v347
        %v1271 = vmul.f32 %v1259, %v347
        %v1272 = vmul.f32 %v1261, %v347
        %v1273 = vmul.f32 %v1263, %v347
        %v1274 = vmul.f32 %v1265, %v347
        %v1275 = vmul.f32 %v1267, %v347
        %v1277 = vsel %vm443, %v1248, 0
        %v1280 = vsel %vm443, %v1249, 0
        %v1283 = vsel %vm443, %v1250, 0
        %v1286 = vsel %vm443, %v1251, 0
        %1288 = vmatpush.msra.mxu0 0.0
        %1289 = vmatpush.msra.mxu0 0.0
        %1290 = vmatpush.msra.mxu0 0.0
        %1291 = vmatpush.msra.mxu0 0.0
        %1292 = vmatpush.msra.mxu0 0.0
        %1293 = vmatpush.msra.mxu0 0.0
        %1294 = vmatpush.msra.mxu0 0.0
        %1295 = vmatpush.msra.mxu0 0.0
        %1296 = vmatpush.msra.mxu0 %v1275
        %1297 = vmatpush.msra.mxu0 %v1274
        %1298 = vmatpush.msra.mxu0 %v1273
        %1299 = vmatpush.msra.mxu0 %v1272
        %1300 = vmatpush.msra.mxu0 %v1271
        %1301 = vmatpush.msra.mxu0 %v1270
        %1302 = vmatpush.msra.mxu0 %v1269
        %1303 = vmatpush.msra.mxu0 %v1268
        %1304 = vmatmul.f32.gmra.mxu0 %v1277
        %v1305 = vpop.f32.mrf.mxu0
        %v1306 = vadd.f32 0.0, %v1305
        %1307 = vmatmul.f32.gmra.mxu0 %v1280
        %v1308 = vpop.f32.mrf.mxu0
        %v1309 = vadd.f32 0.0, %v1308
        %1310 = vmatmul.f32.gmra.mxu0 %v1283
        %v1311 = vpop.f32.mrf.mxu0
        %v1312 = vadd.f32 0.0, %v1311
        %1313 = vmatmul.f32.gmra.mxu0 %v1286
        %v1314 = vpop.f32.mrf.mxu0
        %v1315 = vadd.f32 0.0, %v1314
        %1316 = vdwg.mxu0
        %v1317 = vadd.f32 %v1243, %v1306
        %v1318 = vadd.f32 %v1244, %v1309
        %v1319 = vadd.f32 %v1245, %v1312
        %v1320 = vadd.f32 %v1246, %v1315
        %s1321 = scalar_lea.vmem %s3, 224
        %v1322 = vld [vmem:[%s1321] sm:$0xff]
        %v1323 = vld [vmem:[%s1321 + $0x8] sm:$0xff]
        %v1324 = vld [vmem:[%s1321 + $0x10] sm:$0xff]
        %v1325 = vld [vmem:[%s1321 + $0x18] sm:$0xff]
        %1326 = vrot.lane.b32.xlu0 %v361, 124
        %v1327 = vpop.permute.xlu0 %1326
        %v1328 = vmul.f32 %v1327, %v347
        %v1330 = vsel %vm397, %v1322, 0
        %v1333 = vsel %vm397, %v1323, 0
        %v1336 = vsel %vm397, %v1324, 0
        %v1339 = vsel %vm397, %v1325, 0
        %v1342 = vsel %vm410, %v1328, 0
        %1344 = vmatpush.msra.mxu0 0.0
        %1345 = vmatpush.msra.mxu0 0.0
        %1346 = vmatpush.msra.mxu0 0.0
        %1347 = vmatpush.msra.mxu0 0.0
        %1348 = vmatpush.msra.mxu0 0.0
        %1349 = vmatpush.msra.mxu0 0.0
        %1350 = vmatpush.msra.mxu0 0.0
        %1351 = vmatpush.msra.mxu0 0.0
        %1352 = vmatpush.msra.mxu0 0.0
        %1353 = vmatpush.msra.mxu0 0.0
        %1354 = vmatpush.msra.mxu0 0.0
        %1355 = vmatpush.msra.mxu0 0.0
        %1356 = vmatpush.msra.mxu0 0.0
        %1357 = vmatpush.msra.mxu0 0.0
        %1358 = vmatpush.msra.mxu0 0.0
        %1359 = vmatpush.msra.mxu0 %v1342
        %1360 = vmatmul.f32.gmra.mxu0 %v1330
        %v1361 = vpop.f32.mrf.mxu0
        %v1362 = vadd.f32 0.0, %v1361
        %1363 = vmatmul.f32.gmra.mxu0 %v1333
        %v1364 = vpop.f32.mrf.mxu0
        %v1365 = vadd.f32 0.0, %v1364
        %1366 = vmatmul.f32.gmra.mxu0 %v1336
        %v1367 = vpop.f32.mrf.mxu0
        %v1368 = vadd.f32 0.0, %v1367
        %1369 = vmatmul.f32.gmra.mxu0 %v1339
        %v1370 = vpop.f32.mrf.mxu0
        %v1371 = vadd.f32 0.0, %v1370
        %1372 = vdwg.mxu0
        %v1373 = vadd.f32 %v1317, %v1362
        %v1374 = vadd.f32 %v1318, %v1365
        %v1375 = vadd.f32 %v1319, %v1368
        %v1376 = vadd.f32 %v1320, %v1371
        %s1377 = scalar_lea.vmem %s2, 256
        %v1378 = vld [vmem:[%s1377] sm:$0xff]
        %v1379 = vld [vmem:[%s1377 + $0x8] sm:$0xff]
        %v1380 = vld [vmem:[%s1377 + $0x10] sm:$0xff]
        %v1381 = vld [vmem:[%s1377 + $0x18] sm:$0xff]
        %1382 = vrot.lane.b32.xlu0 %v353, 123
        %v1383 = vpop.permute.xlu0 %1382
        %1384 = vrot.lane.b32.xlu0 %v354, 123
        %v1385 = vpop.permute.xlu0 %1384
        %1386 = vrot.lane.b32.xlu0 %v355, 123
        %v1387 = vpop.permute.xlu0 %1386
        %1388 = vrot.lane.b32.xlu0 %v356, 123
        %v1389 = vpop.permute.xlu0 %1388
        %1390 = vrot.lane.b32.xlu0 %v357, 123
        %v1391 = vpop.permute.xlu0 %1390
        %1392 = vrot.lane.b32.xlu0 %v358, 123
        %v1393 = vpop.permute.xlu0 %1392
        %1394 = vrot.lane.b32.xlu0 %v359, 123
        %v1395 = vpop.permute.xlu0 %1394
        %1396 = vrot.lane.b32.xlu0 %v360, 123
        %v1397 = vpop.permute.xlu0 %1396
        %v1398 = vmul.f32 %v1383, %v352
        %v1399 = vmul.f32 %v1385, %v352
        %v1400 = vmul.f32 %v1387, %v352
        %v1401 = vmul.f32 %v1389, %v352
        %v1402 = vmul.f32 %v1391, %v352
        %v1403 = vmul.f32 %v1393, %v352
        %v1404 = vmul.f32 %v1395, %v352
        %v1405 = vmul.f32 %v1397, %v352
        %v1407 = vsel %vm443, %v1378, 0
        %v1410 = vsel %vm443, %v1379, 0
        %v1413 = vsel %vm443, %v1380, 0
        %v1416 = vsel %vm443, %v1381, 0
        %1418 = vmatpush.msra.mxu0 0.0
        %1419 = vmatpush.msra.mxu0 0.0
        %1420 = vmatpush.msra.mxu0 0.0
        %1421 = vmatpush.msra.mxu0 0.0
        %1422 = vmatpush.msra.mxu0 0.0
        %1423 = vmatpush.msra.mxu0 0.0
        %1424 = vmatpush.msra.mxu0 0.0
        %1425 = vmatpush.msra.mxu0 0.0
        %1426 = vmatpush.msra.mxu0 %v1405
        %1427 = vmatpush.msra.mxu0 %v1404
        %1428 = vmatpush.msra.mxu0 %v1403
        %1429 = vmatpush.msra.mxu0 %v1402
        %1430 = vmatpush.msra.mxu0 %v1401
        %1431 = vmatpush.msra.mxu0 %v1400
        %1432 = vmatpush.msra.mxu0 %v1399
        %1433 = vmatpush.msra.mxu0 %v1398
        %1434 = vmatmul.f32.gmra.mxu0 %v1407
        %v1435 = vpop.f32.mrf.mxu0
        %v1436 = vadd.f32 0.0, %v1435
        %1437 = vmatmul.f32.gmra.mxu0 %v1410
        %v1438 = vpop.f32.mrf.mxu0
        %v1439 = vadd.f32 0.0, %v1438
        %1440 = vmatmul.f32.gmra.mxu0 %v1413
        %v1441 = vpop.f32.mrf.mxu0
        %v1442 = vadd.f32 0.0, %v1441
        %1443 = vmatmul.f32.gmra.mxu0 %v1416
        %v1444 = vpop.f32.mrf.mxu0
        %v1445 = vadd.f32 0.0, %v1444
        %1446 = vdwg.mxu0
        %v1447 = vadd.f32 %v1373, %v1436
        %v1448 = vadd.f32 %v1374, %v1439
        %v1449 = vadd.f32 %v1375, %v1442
        %v1450 = vadd.f32 %v1376, %v1445
        %s1451 = scalar_lea.vmem %s3, 256
        %v1452 = vld [vmem:[%s1451] sm:$0xff]
        %v1453 = vld [vmem:[%s1451 + $0x8] sm:$0xff]
        %v1454 = vld [vmem:[%s1451 + $0x10] sm:$0xff]
        %v1455 = vld [vmem:[%s1451 + $0x18] sm:$0xff]
        %1456 = vrot.lane.b32.xlu0 %v361, 123
        %v1457 = vpop.permute.xlu0 %1456
        %v1458 = vmul.f32 %v1457, %v352
        %v1460 = vsel %vm397, %v1452, 0
        %v1463 = vsel %vm397, %v1453, 0
        %v1466 = vsel %vm397, %v1454, 0
        %v1469 = vsel %vm397, %v1455, 0
        %v1472 = vsel %vm410, %v1458, 0
        %1474 = vmatpush.msra.mxu0 0.0
        %1475 = vmatpush.msra.mxu0 0.0
        %1476 = vmatpush.msra.mxu0 0.0
        %1477 = vmatpush.msra.mxu0 0.0
        %1478 = vmatpush.msra.mxu0 0.0
        %1479 = vmatpush.msra.mxu0 0.0
        %1480 = vmatpush.msra.mxu0 0.0
        %1481 = vmatpush.msra.mxu0 0.0
        %1482 = vmatpush.msra.mxu0 0.0
        %1483 = vmatpush.msra.mxu0 0.0
        %1484 = vmatpush.msra.mxu0 0.0
        %1485 = vmatpush.msra.mxu0 0.0
        %1486 = vmatpush.msra.mxu0 0.0
        %1487 = vmatpush.msra.mxu0 0.0
        %1488 = vmatpush.msra.mxu0 0.0
        %1489 = vmatpush.msra.mxu0 %v1472
        %1490 = vmatmul.f32.gmra.mxu0 %v1460
        %v1491 = vpop.f32.mrf.mxu0
        %v1492 = vadd.f32 0.0, %v1491
        %1493 = vmatmul.f32.gmra.mxu0 %v1463
        %v1494 = vpop.f32.mrf.mxu0
        %v1495 = vadd.f32 0.0, %v1494
        %1496 = vmatmul.f32.gmra.mxu0 %v1466
        %v1497 = vpop.f32.mrf.mxu0
        %v1498 = vadd.f32 0.0, %v1497
        %1499 = vmatmul.f32.gmra.mxu0 %v1469
        %v1500 = vpop.f32.mrf.mxu0
        %v1501 = vadd.f32 0.0, %v1500
        %1502 = vdwg.mxu0
        %v1503 = vadd.f32 %v1447, %v1492
        %v1504 = vadd.f32 %v1448, %v1495
        %v1505 = vadd.f32 %v1449, %v1498
        %v1506 = vadd.f32 %v1450, %v1501
        %v1507 = vadd.f32 %v1503, %v1504
        %v1508 = vadd.f32 %v1507, %v1505
        %v1509 = vadd.f32 %v1508, %v1506
        %1510 = vadd.xlane.f32.xlu0 %v1509
        %v1511 = vpop.xlane.xlu0 %1510
        %v1512 = vrot.slane %v1511, 4
        %v1513 = vadd.f32 %v1511, %v1512
        %v1514 = vrot.slane %v1513, 2
        %v1515 = vadd.f32 %v1513, %v1514
        %v1516 = vrot.slane %v1515, 1
        %v1517 = vadd.f32 %v1515, %v1516
        %s1518 = vtos %v1517
        %v1519 = vmul.f32 %v1503, %v1503
        %v1520 = vmul.f32 %v1504, %v1504
        %v1521 = vmul.f32 %v1505, %v1505
        %v1522 = vmul.f32 %v1506, %v1506
        %v1523 = vadd.f32 %v1519, %v1520
        %v1524 = vadd.f32 %v1523, %v1521
        %v1525 = vadd.f32 %v1524, %v1522
        %1526 = vadd.xlane.f32.xlu0 %v1525
        %v1527 = vpop.xlane.xlu0 %1526
        %v1528 = vrot.slane %v1527, 4
        %v1529 = vadd.f32 %v1527, %v1528
        %v1530 = vrot.slane %v1529, 2
        %v1531 = vadd.f32 %v1529, %v1530
        %v1532 = vrot.slane %v1531, 1
        %v1533 = vadd.f32 %v1531, %v1532
        %s1534 = vtos %v1533
        %v1535 = vrcp.pop 512.0
        %v1536 = vmul.f32 512.0, %v1535
        %v1537 = vsub.f32 1.0, %v1536
        %v1538 = vmul.f32 %v1535, %v1537
        %v1539 = vadd.f32 %v1535, %v1538
        %vm1540 = vweird.f32 %v1535
        %v1541 = vsel %vm1540, %v1535, %v1539
        %s1542 = vtos %v1541
        %s1543 = smul.f32 %s1518, %s1542
        %v1544 = vrcp.pop 512.0
        %v1545 = vmul.f32 512.0, %v1544
        %v1546 = vsub.f32 1.0, %v1545
        %v1547 = vmul.f32 %v1544, %v1546
        %v1548 = vadd.f32 %v1544, %v1547
        %vm1549 = vweird.f32 %v1544
        %v1550 = vsel %vm1549, %v1544, %v1548
        %s1551 = vtos %v1550
        %s1552 = smul.f32 %s1534, %s1551
        %s1553 = smul.f32 %s1543, %s1543
        %s1554 = ssub.f32 %s1552, %s1553
        %s1555 = sadd.f32 %s1554, 1e-05
        %v1556 = vstv %s1555
        %v1557 = vrsqrt.pop %v1556
        %v1558 = vmul.f32 %v1557, %v1556
        %v1559 = vmul.f32 %v1558, %v1557
        %v1560 = vmul.f32 0.5, %v1559
        %v1561 = vsub.f32 1.5, %v1560
        %v1562 = vmul.f32 %v1557, %v1561
        %vm1563 = vweird.f32 %v1556
        %vm1564 = vweird.f32 %v1557
        %vm1565 = vmor %vm1563, %vm1564
        %v1566 = vsel %vm1565, %v1557, %v1562
        %s1567 = vtos %v1566
        %v1568 = vstv %s1543
        %v1569 = vsub.f32 %v1503, %v1568
        %v1570 = vsub.f32 %v1504, %v1568
        %v1571 = vsub.f32 %v1505, %v1568
        %v1572 = vsub.f32 %v1506, %v1568
        %v1573 = vstv %s1567
        %v1574 = vmul.f32 %v1569, %v1573
        %v1575 = vmul.f32 %v1570, %v1573
        %v1576 = vmul.f32 %v1571, %v1573
        %v1577 = vmul.f32 %v1572, %v1573
        %v1578 = vmax.f32 %v1574, 0.0
        %v1579 = vmax.f32 %v1575, 0.0
        %v1580 = vmax.f32 %v1576, 0.0
        %v1581 = vmax.f32 %v1577, 0.0
        %v1582 = vld [vmem:[#allocation5] sm:$0xff]
        %v1583 = vld [vmem:[#allocation5 + $0x8] sm:$0xff]
        %v1584 = vld [vmem:[#allocation5 + $0x10] sm:$0xff]
        %v1585 = vld [vmem:[#allocation5 + $0x18] sm:$0xff]
        %1586 = vrot.lane.b32.xlu0 %v1578, 5
        %v1587 = vpop.permute.xlu0 %1586
        %1588 = vrot.lane.b32.xlu0 %v1579, 5
        %v1589 = vpop.permute.xlu0 %1588
        %1590 = vrot.lane.b32.xlu0 %v1580, 5
        %v1591 = vpop.permute.xlu0 %1590
        %1592 = vrot.lane.b32.xlu0 %v1581, 5
        %v1593 = vpop.permute.xlu0 %1592
        %v1594 = vmul.f32 %v1587, %v300
        %v1595 = vmul.f32 %v1589, %v300
        %v1596 = vmul.f32 %v1591, %v300
        %v1597 = vmul.f32 %v1593, %v300
        %s1598 = scalar_lea.vmem [#allocation5], 32
        %v1599 = vld [vmem:[%s1598] sm:$0xff]
        %v1600 = vld [vmem:[%s1598 + $0x8] sm:$0xff]
        %v1601 = vld [vmem:[%s1598 + $0x10] sm:$0xff]
        %v1602 = vld [vmem:[%s1598 + $0x18] sm:$0xff]
        %1603 = vrot.lane.b32.xlu0 %v1578, 4
        %v1604 = vpop.permute.xlu0 %1603
        %1605 = vrot.lane.b32.xlu0 %v1579, 4
        %v1606 = vpop.permute.xlu0 %1605
        %1607 = vrot.lane.b32.xlu0 %v1580, 4
        %v1608 = vpop.permute.xlu0 %1607
        %1609 = vrot.lane.b32.xlu0 %v1581, 4
        %v1610 = vpop.permute.xlu0 %1609
        %v1611 = vmul.f32 %v1604, %v307
        %v1612 = vmul.f32 %v1606, %v307
        %v1613 = vmul.f32 %v1608, %v307
        %v1614 = vmul.f32 %v1610, %v307
        %vm1615 = vcmask 261120
        %v1617 = vsel %vm1615, %v1599, 0
        %v1620 = vsel %vm1615, %v1600, 0
        %v1623 = vsel %vm1615, %v1601, 0
        %v1626 = vsel %vm1615, %v1602, 0
        %1628 = vmatpush.msra.mxu0 0.0
        %1629 = vmatpush.msra.mxu0 0.0
        %1630 = vmatpush.msra.mxu0 0.0
        %1631 = vmatpush.msra.mxu0 0.0
        %1632 = vmatpush.msra.mxu0 0.0
        %1633 = vmatpush.msra.mxu0 0.0
        %1634 = vmatpush.msra.mxu0 0.0
        %1635 = vmatpush.msra.mxu0 0.0
        %1636 = vmatpush.msra.mxu0 0.0
        %1637 = vmatpush.msra.mxu0 0.0
        %1638 = vmatpush.msra.mxu0 0.0
        %1639 = vmatpush.msra.mxu0 0.0
        %1640 = vmatpush.msra.mxu0 %v1614
        %1641 = vmatpush.msra.mxu0 %v1613
        %1642 = vmatpush.msra.mxu0 %v1612
        %1643 = vmatpush.msra.mxu0 %v1611
        %1644 = vmatmul.f32.gmra.mxu0 %v1617
        %v1645 = vpop.f32.mrf.mxu0
        %v1646 = vadd.f32 0.0, %v1645
        %1647 = vmatmul.f32.gmra.mxu0 %v1620
        %v1648 = vpop.f32.mrf.mxu0
        %v1649 = vadd.f32 0.0, %v1648
        %1650 = vmatmul.f32.gmra.mxu0 %v1623
        %v1651 = vpop.f32.mrf.mxu0
        %v1652 = vadd.f32 0.0, %v1651
        %1653 = vmatmul.f32.gmra.mxu0 %v1626
        %v1654 = vpop.f32.mrf.mxu0
        %v1655 = vadd.f32 0.0, %v1654
        %1656 = vdwg.mxu0
        %v1658 = vsel %vm1615, %v1582, 0
        %v1661 = vsel %vm1615, %v1583, 0
        %v1664 = vsel %vm1615, %v1584, 0
        %v1667 = vsel %vm1615, %v1585, 0
        %1669 = vmatpush.msra.mxu0 0.0
        %1670 = vmatpush.msra.mxu0 0.0
        %1671 = vmatpush.msra.mxu0 0.0
        %1672 = vmatpush.msra.mxu0 0.0
        %1673 = vmatpush.msra.mxu0 0.0
        %1674 = vmatpush.msra.mxu0 0.0
        %1675 = vmatpush.msra.mxu0 0.0
        %1676 = vmatpush.msra.mxu0 0.0
        %1677 = vmatpush.msra.mxu0 0.0
        %1678 = vmatpush.msra.mxu0 0.0
        %1679 = vmatpush.msra.mxu0 0.0
        %1680 = vmatpush.msra.mxu0 0.0
        %1681 = vmatpush.msra.mxu0 %v1597
        %1682 = vmatpush.msra.mxu0 %v1596
        %1683 = vmatpush.msra.mxu0 %v1595
        %1684 = vmatpush.msra.mxu0 %v1594
        %1685 = vmatmul.f32.gmra.mxu0 %v1658
        %v1686 = vpop.f32.mrf.mxu0
        %v1687 = vadd.f32 %v1646, %v1686
        %1688 = vmatmul.f32.gmra.mxu0 %v1661
        %v1689 = vpop.f32.mrf.mxu0
        %v1690 = vadd.f32 %v1649, %v1689
        %1691 = vmatmul.f32.gmra.mxu0 %v1664
        %v1692 = vpop.f32.mrf.mxu0
        %v1693 = vadd.f32 %v1652, %v1692
        %1694 = vmatmul.f32.gmra.mxu0 %v1667
        %v1695 = vpop.f32.mrf.mxu0
        %v1696 = vadd.f32 %v1655, %v1695
        %1697 = vdwg.mxu0
        %s1698 = scalar_lea.vmem [#allocation5], 64
        %v1699 = vld [vmem:[%s1698] sm:$0xff]
        %v1700 = vld [vmem:[%s1698 + $0x8] sm:$0xff]
        %v1701 = vld [vmem:[%s1698 + $0x10] sm:$0xff]
        %v1702 = vld [vmem:[%s1698 + $0x18] sm:$0xff]
        %1703 = vrot.lane.b32.xlu0 %v1578, 3
        %v1704 = vpop.permute.xlu0 %1703
        %1705 = vrot.lane.b32.xlu0 %v1579, 3
        %v1706 = vpop.permute.xlu0 %1705
        %1707 = vrot.lane.b32.xlu0 %v1580, 3
        %v1708 = vpop.permute.xlu0 %1707
        %1709 = vrot.lane.b32.xlu0 %v1581, 3
        %v1710 = vpop.permute.xlu0 %1709
        %v1711 = vmul.f32 %v1704, %v315
        %v1712 = vmul.f32 %v1706, %v315
        %v1713 = vmul.f32 %v1708, %v315
        %v1714 = vmul.f32 %v1710, %v315
        %v1716 = vsel %vm1615, %v1699, 0
        %v1719 = vsel %vm1615, %v1700, 0
        %v1722 = vsel %vm1615, %v1701, 0
        %v1725 = vsel %vm1615, %v1702, 0
        %1727 = vmatpush.msra.mxu0 0.0
        %1728 = vmatpush.msra.mxu0 0.0
        %1729 = vmatpush.msra.mxu0 0.0
        %1730 = vmatpush.msra.mxu0 0.0
        %1731 = vmatpush.msra.mxu0 0.0
        %1732 = vmatpush.msra.mxu0 0.0
        %1733 = vmatpush.msra.mxu0 0.0
        %1734 = vmatpush.msra.mxu0 0.0
        %1735 = vmatpush.msra.mxu0 0.0
        %1736 = vmatpush.msra.mxu0 0.0
        %1737 = vmatpush.msra.mxu0 0.0
        %1738 = vmatpush.msra.mxu0 0.0
        %1739 = vmatpush.msra.mxu0 %v1714
        %1740 = vmatpush.msra.mxu0 %v1713
        %1741 = vmatpush.msra.mxu0 %v1712
        %1742 = vmatpush.msra.mxu0 %v1711
        %1743 = vmatmul.f32.gmra.mxu0 %v1716
        %v1744 = vpop.f32.mrf.mxu0
        %v1745 = vadd.f32 0.0, %v1744
        %1746 = vmatmul.f32.gmra.mxu0 %v1719
        %v1747 = vpop.f32.mrf.mxu0
        %v1748 = vadd.f32 0.0, %v1747
        %1749 = vmatmul.f32.gmra.mxu0 %v1722
        %v1750 = vpop.f32.mrf.mxu0
        %v1751 = vadd.f32 0.0, %v1750
        %1752 = vmatmul.f32.gmra.mxu0 %v1725
        %v1753 = vpop.f32.mrf.mxu0
        %v1754 = vadd.f32 0.0, %v1753
        %1755 = vdwg.mxu0
        %v1756 = vadd.f32 %v1687, %v1745
        %v1757 = vadd.f32 %v1690, %v1748
        %v1758 = vadd.f32 %v1693, %v1751
        %v1759 = vadd.f32 %v1696, %v1754
        %s1760 = scalar_lea.vmem [#allocation5], 96
        %v1761 = vld [vmem:[%s1760] sm:$0xff]
        %v1762 = vld [vmem:[%s1760 + $0x8] sm:$0xff]
        %v1763 = vld [vmem:[%s1760 + $0x10] sm:$0xff]
        %v1764 = vld [vmem:[%s1760 + $0x18] sm:$0xff]
        %1765 = vrot.lane.b32.xlu0 %v1578, 1
        %v1766 = vpop.permute.xlu0 %1765
        %1767 = vrot.lane.b32.xlu0 %v1579, 1
        %v1768 = vpop.permute.xlu0 %1767
        %1769 = vrot.lane.b32.xlu0 %v1580, 1
        %v1770 = vpop.permute.xlu0 %1769
        %1771 = vrot.lane.b32.xlu0 %v1581, 1
        %v1772 = vpop.permute.xlu0 %1771
        %v1773 = vmul.f32 %v1766, %v323
        %v1774 = vmul.f32 %v1768, %v323
        %v1775 = vmul.f32 %v1770, %v323
        %v1776 = vmul.f32 %v1772, %v323
        %v1778 = vsel %vm1615, %v1761, 0
        %v1781 = vsel %vm1615, %v1762, 0
        %v1784 = vsel %vm1615, %v1763, 0
        %v1787 = vsel %vm1615, %v1764, 0
        %1789 = vmatpush.msra.mxu0 0.0
        %1790 = vmatpush.msra.mxu0 0.0
        %1791 = vmatpush.msra.mxu0 0.0
        %1792 = vmatpush.msra.mxu0 0.0
        %1793 = vmatpush.msra.mxu0 0.0
        %1794 = vmatpush.msra.mxu0 0.0
        %1795 = vmatpush.msra.mxu0 0.0
        %1796 = vmatpush.msra.mxu0 0.0
        %1797 = vmatpush.msra.mxu0 0.0
        %1798 = vmatpush.msra.mxu0 0.0
        %1799 = vmatpush.msra.mxu0 0.0
        %1800 = vmatpush.msra.mxu0 0.0
        %1801 = vmatpush.msra.mxu0 %v1776
        %1802 = vmatpush.msra.mxu0 %v1775
        %1803 = vmatpush.msra.mxu0 %v1774
        %1804 = vmatpush.msra.mxu0 %v1773
        %1805 = vmatmul.f32.gmra.mxu0 %v1778
        %v1806 = vpop.f32.mrf.mxu0
        %v1807 = vadd.f32 0.0, %v1806
        %1808 = vmatmul.f32.gmra.mxu0 %v1781
        %v1809 = vpop.f32.mrf.mxu0
        %v1810 = vadd.f32 0.0, %v1809
        %1811 = vmatmul.f32.gmra.mxu0 %v1784
        %v1812 = vpop.f32.mrf.mxu0
        %v1813 = vadd.f32 0.0, %v1812
        %1814 = vmatmul.f32.gmra.mxu0 %v1787
        %v1815 = vpop.f32.mrf.mxu0
        %v1816 = vadd.f32 0.0, %v1815
        %1817 = vdwg.mxu0
        %v1818 = vadd.f32 %v1756, %v1807
        %v1819 = vadd.f32 %v1757, %v1810
        %v1820 = vadd.f32 %v1758, %v1813
        %v1821 = vadd.f32 %v1759, %v1816
        %s1822 = scalar_lea.vmem [#allocation5], 128
        %v1823 = vld [vmem:[%s1822] sm:$0xff]
        %v1824 = vld [vmem:[%s1822 + $0x8] sm:$0xff]
        %v1825 = vld [vmem:[%s1822 + $0x10] sm:$0xff]
        %v1826 = vld [vmem:[%s1822 + $0x18] sm:$0xff]
        %v1827 = vmul.f32 %v1578, %v328
        %v1828 = vmul.f32 %v1579, %v328
        %v1829 = vmul.f32 %v1580, %v328
        %v1830 = vmul.f32 %v1581, %v328
        %v1832 = vsel %vm1615, %v1823, 0
        %v1835 = vsel %vm1615, %v1824, 0
        %v1838 = vsel %vm1615, %v1825, 0
        %v1841 = vsel %vm1615, %v1826, 0
        %1843 = vmatpush.msra.mxu0 0.0
        %1844 = vmatpush.msra.mxu0 0.0
        %1845 = vmatpush.msra.mxu0 0.0
        %1846 = vmatpush.msra.mxu0 0.0
        %1847 = vmatpush.msra.mxu0 0.0
        %1848 = vmatpush.msra.mxu0 0.0
        %1849 = vmatpush.msra.mxu0 0.0
        %1850 = vmatpush.msra.mxu0 0.0
        %1851 = vmatpush.msra.mxu0 0.0
        %1852 = vmatpush.msra.mxu0 0.0
        %1853 = vmatpush.msra.mxu0 0.0
        %1854 = vmatpush.msra.mxu0 0.0
        %1855 = vmatpush.msra.mxu0 %v1830
        %1856 = vmatpush.msra.mxu0 %v1829
        %1857 = vmatpush.msra.mxu0 %v1828
        %1858 = vmatpush.msra.mxu0 %v1827
        %1859 = vmatmul.f32.gmra.mxu0 %v1832
        %v1860 = vpop.f32.mrf.mxu0
        %v1861 = vadd.f32 0.0, %v1860
        %1862 = vmatmul.f32.gmra.mxu0 %v1835
        %v1863 = vpop.f32.mrf.mxu0
        %v1864 = vadd.f32 0.0, %v1863
        %1865 = vmatmul.f32.gmra.mxu0 %v1838
        %v1866 = vpop.f32.mrf.mxu0
        %v1867 = vadd.f32 0.0, %v1866
        %1868 = vmatmul.f32.gmra.mxu0 %v1841
        %v1869 = vpop.f32.mrf.mxu0
        %v1870 = vadd.f32 0.0, %v1869
        %1871 = vdwg.mxu0
        %v1872 = vadd.f32 %v1818, %v1861
        %v1873 = vadd.f32 %v1819, %v1864
        %v1874 = vadd.f32 %v1820, %v1867
        %v1875 = vadd.f32 %v1821, %v1870
        %s1876 = scalar_lea.vmem [#allocation5], 160
        %v1877 = vld [vmem:[%s1876] sm:$0xff]
        %v1878 = vld [vmem:[%s1876 + $0x8] sm:$0xff]
        %v1879 = vld [vmem:[%s1876 + $0x10] sm:$0xff]
        %v1880 = vld [vmem:[%s1876 + $0x18] sm:$0xff]
        %1881 = vrot.lane.b32.xlu0 %v1578, 127
        %v1882 = vpop.permute.xlu0 %1881
        %1883 = vrot.lane.b32.xlu0 %v1579, 127
        %v1884 = vpop.permute.xlu0 %1883
        %1885 = vrot.lane.b32.xlu0 %v1580, 127
        %v1886 = vpop.permute.xlu0 %1885
        %1887 = vrot.lane.b32.xlu0 %v1581, 127
        %v1888 = vpop.permute.xlu0 %1887
        %v1889 = vmul.f32 %v1882, %v333
        %v1890 = vmul.f32 %v1884, %v333
        %v1891 = vmul.f32 %v1886, %v333
        %v1892 = vmul.f32 %v1888, %v333
        %v1894 = vsel %vm1615, %v1877, 0
        %v1897 = vsel %vm1615, %v1878, 0
        %v1900 = vsel %vm1615, %v1879, 0
        %v1903 = vsel %vm1615, %v1880, 0
        %1905 = vmatpush.msra.mxu0 0.0
        %1906 = vmatpush.msra.mxu0 0.0
        %1907 = vmatpush.msra.mxu0 0.0
        %1908 = vmatpush.msra.mxu0 0.0
        %1909 = vmatpush.msra.mxu0 0.0
        %1910 = vmatpush.msra.mxu0 0.0
        %1911 = vmatpush.msra.mxu0 0.0
        %1912 = vmatpush.msra.mxu0 0.0
        %1913 = vmatpush.msra.mxu0 0.0
        %1914 = vmatpush.msra.mxu0 0.0
        %1915 = vmatpush.msra.mxu0 0.0
        %1916 = vmatpush.msra.mxu0 0.0
        %1917 = vmatpush.msra.mxu0 %v1892
        %1918 = vmatpush.msra.mxu0 %v1891
        %1919 = vmatpush.msra.mxu0 %v1890
        %1920 = vmatpush.msra.mxu0 %v1889
        %1921 = vmatmul.f32.gmra.mxu0 %v1894
        %v1922 = vpop.f32.mrf.mxu0
        %v1923 = vadd.f32 0.0, %v1922
        %1924 = vmatmul.f32.gmra.mxu0 %v1897
        %v1925 = vpop.f32.mrf.mxu0
        %v1926 = vadd.f32 0.0, %v1925
        %1927 = vmatmul.f32.gmra.mxu0 %v1900
        %v1928 = vpop.f32.mrf.mxu0
        %v1929 = vadd.f32 0.0, %v1928
        %1930 = vmatmul.f32.gmra.mxu0 %v1903
        %v1931 = vpop.f32.mrf.mxu0
        %v1932 = vadd.f32 0.0, %v1931
        %1933 = vdwg.mxu0
        %v1934 = vadd.f32 %v1872, %v1923
        %v1935 = vadd.f32 %v1873, %v1926
        %v1936 = vadd.f32 %v1874, %v1929
        %v1937 = vadd.f32 %v1875, %v1932
        %s1938 = scalar_lea.vmem [#allocation5], 192
        %v1939 = vld [vmem:[%s1938] sm:$0xff]
        %v1940 = vld [vmem:[%s1938 + $0x8] sm:$0xff]
        %v1941 = vld [vmem:[%s1938 + $0x10] sm:$0xff]
        %v1942 = vld [vmem:[%s1938 + $0x18] sm:$0xff]
        %1943 = vrot.lane.b32.xlu0 %v1578, 125
        %v1944 = vpop.permute.xlu0 %1943
        %1945 = vrot.lane.b32.xlu0 %v1579, 125
        %v1946 = vpop.permute.xlu0 %1945
        %1947 = vrot.lane.b32.xlu0 %v1580, 125
        %v1948 = vpop.permute.xlu0 %1947
        %1949 = vrot.lane.b32.xlu0 %v1581, 125
        %v1950 = vpop.permute.xlu0 %1949
        %v1951 = vmul.f32 %v1944, %v342
        %v1952 = vmul.f32 %v1946, %v342
        %v1953 = vmul.f32 %v1948, %v342
        %v1954 = vmul.f32 %v1950, %v342
        %v1956 = vsel %vm1615, %v1939, 0
        %v1959 = vsel %vm1615, %v1940, 0
        %v1962 = vsel %vm1615, %v1941, 0
        %v1965 = vsel %vm1615, %v1942, 0
        %1967 = vmatpush.msra.mxu0 0.0
        %1968 = vmatpush.msra.mxu0 0.0
        %1969 = vmatpush.msra.mxu0 0.0
        %1970 = vmatpush.msra.mxu0 0.0
        %1971 = vmatpush.msra.mxu0 0.0
        %1972 = vmatpush.msra.mxu0 0.0
        %1973 = vmatpush.msra.mxu0 0.0
        %1974 = vmatpush.msra.mxu0 0.0
        %1975 = vmatpush.msra.mxu0 0.0
        %1976 = vmatpush.msra.mxu0 0.0
        %1977 = vmatpush.msra.mxu0 0.0
        %1978 = vmatpush.msra.mxu0 0.0
        %1979 = vmatpush.msra.mxu0 %v1954
        %1980 = vmatpush.msra.mxu0 %v1953
        %1981 = vmatpush.msra.mxu0 %v1952
        %1982 = vmatpush.msra.mxu0 %v1951
        %1983 = vmatmul.f32.gmra.mxu0 %v1956
        %v1984 = vpop.f32.mrf.mxu0
        %v1985 = vadd.f32 0.0, %v1984
        %1986 = vmatmul.f32.gmra.mxu0 %v1959
        %v1987 = vpop.f32.mrf.mxu0
        %v1988 = vadd.f32 0.0, %v1987
        %1989 = vmatmul.f32.gmra.mxu0 %v1962
        %v1990 = vpop.f32.mrf.mxu0
        %v1991 = vadd.f32 0.0, %v1990
        %1992 = vmatmul.f32.gmra.mxu0 %v1965
        %v1993 = vpop.f32.mrf.mxu0
        %v1994 = vadd.f32 0.0, %v1993
        %1995 = vdwg.mxu0
        %v1996 = vadd.f32 %v1934, %v1985
        %v1997 = vadd.f32 %v1935, %v1988
        %v1998 = vadd.f32 %v1936, %v1991
        %v1999 = vadd.f32 %v1937, %v1994
        %s2000 = scalar_lea.vmem [#allocation5], 224
        %v2001 = vld [vmem:[%s2000] sm:$0xff]
        %v2002 = vld [vmem:[%s2000 + $0x8] sm:$0xff]
        %v2003 = vld [vmem:[%s2000 + $0x10] sm:$0xff]
        %v2004 = vld [vmem:[%s2000 + $0x18] sm:$0xff]
        %2005 = vrot.lane.b32.xlu0 %v1578, 124
        %v2006 = vpop.permute.xlu0 %2005
        %2007 = vrot.lane.b32.xlu0 %v1579, 124
        %v2008 = vpop.permute.xlu0 %2007
        %2009 = vrot.lane.b32.xlu0 %v1580, 124
        %v2010 = vpop.permute.xlu0 %2009
        %2011 = vrot.lane.b32.xlu0 %v1581, 124
        %v2012 = vpop.permute.xlu0 %2011
        %v2013 = vmul.f32 %v2006, %v347
        %v2014 = vmul.f32 %v2008, %v347
        %v2015 = vmul.f32 %v2010, %v347
        %v2016 = vmul.f32 %v2012, %v347
        %v2018 = vsel %vm1615, %v2001, 0
        %v2021 = vsel %vm1615, %v2002, 0
        %v2024 = vsel %vm1615, %v2003, 0
        %v2027 = vsel %vm1615, %v2004, 0
        %2029 = vmatpush.msra.mxu0 0.0
        %2030 = vmatpush.msra.mxu0 0.0
        %2031 = vmatpush.msra.mxu0 0.0
        %2032 = vmatpush.msra.mxu0 0.0
        %2033 = vmatpush.msra.mxu0 0.0
        %2034 = vmatpush.msra.mxu0 0.0
        %2035 = vmatpush.msra.mxu0 0.0
        %2036 = vmatpush.msra.mxu0 0.0
        %2037 = vmatpush.msra.mxu0 0.0
        %2038 = vmatpush.msra.mxu0 0.0
        %2039 = vmatpush.msra.mxu0 0.0
        %2040 = vmatpush.msra.mxu0 0.0
        %2041 = vmatpush.msra.mxu0 %v2016
        %2042 = vmatpush.msra.mxu0 %v2015
        %2043 = vmatpush.msra.mxu0 %v2014
        %2044 = vmatpush.msra.mxu0 %v2013
        %2045 = vmatmul.f32.gmra.mxu0 %v2018
        %v2046 = vpop.f32.mrf.mxu0
        %v2047 = vadd.f32 0.0, %v2046
        %2048 = vmatmul.f32.gmra.mxu0 %v2021
        %v2049 = vpop.f32.mrf.mxu0
        %v2050 = vadd.f32 0.0, %v2049
        %2051 = vmatmul.f32.gmra.mxu0 %v2024
        %v2052 = vpop.f32.mrf.mxu0
        %v2053 = vadd.f32 0.0, %v2052
        %2054 = vmatmul.f32.gmra.mxu0 %v2027
        %v2055 = vpop.f32.mrf.mxu0
        %v2056 = vadd.f32 0.0, %v2055
        %2057 = vdwg.mxu0
        %v2058 = vadd.f32 %v1996, %v2047
        %v2059 = vadd.f32 %v1997, %v2050
        %v2060 = vadd.f32 %v1998, %v2053
        %v2061 = vadd.f32 %v1999, %v2056
        %s2062 = scalar_lea.vmem [#allocation5], 256
        %v2063 = vld [vmem:[%s2062] sm:$0xff]
        %v2064 = vld [vmem:[%s2062 + $0x8] sm:$0xff]
        %v2065 = vld [vmem:[%s2062 + $0x10] sm:$0xff]
        %v2066 = vld [vmem:[%s2062 + $0x18] sm:$0xff]
        %2067 = vrot.lane.b32.xlu0 %v1578, 123
        %v2068 = vpop.permute.xlu0 %2067
        %2069 = vrot.lane.b32.xlu0 %v1579, 123
        %v2070 = vpop.permute.xlu0 %2069
        %2071 = vrot.lane.b32.xlu0 %v1580, 123
        %v2072 = vpop.permute.xlu0 %2071
        %2073 = vrot.lane.b32.xlu0 %v1581, 123
        %v2074 = vpop.permute.xlu0 %2073
        %v2075 = vmul.f32 %v2068, %v352
        %v2076 = vmul.f32 %v2070, %v352
        %v2077 = vmul.f32 %v2072, %v352
        %v2078 = vmul.f32 %v2074, %v352
        %v2080 = vsel %vm1615, %v2063, 0
        %v2083 = vsel %vm1615, %v2064, 0
        %v2086 = vsel %vm1615, %v2065, 0
        %v2089 = vsel %vm1615, %v2066, 0
        %2091 = vmatpush.msra.mxu0 0.0
        %2092 = vmatpush.msra.mxu0 0.0
        %2093 = vmatpush.msra.mxu0 0.0
        %2094 = vmatpush.msra.mxu0 0.0
        %2095 = vmatpush.msra.mxu0 0.0
        %2096 = vmatpush.msra.mxu0 0.0
        %2097 = vmatpush.msra.mxu0 0.0
        %2098 = vmatpush.msra.mxu0 0.0
        %2099 = vmatpush.msra.mxu0 0.0
        %2100 = vmatpush.msra.mxu0 0.0
        %2101 = vmatpush.msra.mxu0 0.0
        %2102 = vmatpush.msra.mxu0 0.0
        %2103 = vmatpush.msra.mxu0 %v2078
        %2104 = vmatpush.msra.mxu0 %v2077
        %2105 = vmatpush.msra.mxu0 %v2076
        %2106 = vmatpush.msra.mxu0 %v2075
        %2107 = vmatmul.f32.gmra.mxu0 %v2080
        %v2108 = vpop.f32.mrf.mxu0
        %v2109 = vadd.f32 0.0, %v2108
        %2110 = vmatmul.f32.gmra.mxu0 %v2083
        %v2111 = vpop.f32.mrf.mxu0
        %v2112 = vadd.f32 0.0, %v2111
        %2113 = vmatmul.f32.gmra.mxu0 %v2086
        %v2114 = vpop.f32.mrf.mxu0
        %v2115 = vadd.f32 0.0, %v2114
        %2116 = vmatmul.f32.gmra.mxu0 %v2089
        %v2117 = vpop.f32.mrf.mxu0
        %v2118 = vadd.f32 0.0, %v2117
        %2119 = vdwg.mxu0
        %v2120 = vadd.f32 %v2058, %v2109
        %v2121 = vadd.f32 %v2059, %v2112
        %v2122 = vadd.f32 %v2060, %v2115
        %v2123 = vadd.f32 %v2061, %v2118
        %v2124 = vadd.f32 %v2120, %v2121
        %v2125 = vadd.f32 %v2124, %v2122
        %v2126 = vadd.f32 %v2125, %v2123
        %2127 = vadd.xlane.f32.xlu0 %v2126
        %v2128 = vpop.xlane.xlu0 %2127
        %v2129 = vrot.slane %v2128, 4
        %v2130 = vadd.f32 %v2128, %v2129
        %v2131 = vrot.slane %v2130, 2
        %v2132 = vadd.f32 %v2130, %v2131
        %v2133 = vrot.slane %v2132, 1
        %v2134 = vadd.f32 %v2132, %v2133
        %s2135 = vtos %v2134
        %v2136 = vmul.f32 %v2120, %v2120
        %v2137 = vmul.f32 %v2121, %v2121
        %v2138 = vmul.f32 %v2122, %v2122
        %v2139 = vmul.f32 %v2123, %v2123
        %v2140 = vadd.f32 %v2136, %v2137
        %v2141 = vadd.f32 %v2140, %v2138
        %v2142 = vadd.f32 %v2141, %v2139
        %2143 = vadd.xlane.f32.xlu0 %v2142
        %v2144 = vpop.xlane.xlu0 %2143
        %v2145 = vrot.slane %v2144, 4
        %v2146 = vadd.f32 %v2144, %v2145
        %v2147 = vrot.slane %v2146, 2
        %v2148 = vadd.f32 %v2146, %v2147
        %v2149 = vrot.slane %v2148, 1
        %v2150 = vadd.f32 %v2148, %v2149
        %s2151 = vtos %v2150
        %v2152 = vrcp.pop 512.0
        %v2153 = vmul.f32 512.0, %v2152
        %v2154 = vsub.f32 1.0, %v2153
        %v2155 = vmul.f32 %v2152, %v2154
        %v2156 = vadd.f32 %v2152, %v2155
        %vm2157 = vweird.f32 %v2152
        %v2158 = vsel %vm2157, %v2152, %v2156
        %s2159 = vtos %v2158
        %s2160 = smul.f32 %s2135, %s2159
        %v2161 = vrcp.pop 512.0
        %v2162 = vmul.f32 512.0, %v2161
        %v2163 = vsub.f32 1.0, %v2162
        %v2164 = vmul.f32 %v2161, %v2163
        %v2165 = vadd.f32 %v2161, %v2164
        %vm2166 = vweird.f32 %v2161
        %v2167 = vsel %vm2166, %v2161, %v2165
        %s2168 = vtos %v2167
        %s2169 = smul.f32 %s2151, %s2168
        %s2170 = smul.f32 %s2160, %s2160
        %s2171 = ssub.f32 %s2169, %s2170
        %s2172 = sadd.f32 %s2171, 1e-05
        %v2173 = vstv %s2172
        %v2174 = vrsqrt.pop %v2173
        %v2175 = vmul.f32 %v2174, %v2173
        %v2176 = vmul.f32 %v2175, %v2174
        %v2177 = vmul.f32 0.5, %v2176
        %v2178 = vsub.f32 1.5, %v2177
        %v2179 = vmul.f32 %v2174, %v2178
        %vm2180 = vweird.f32 %v2173
        %vm2181 = vweird.f32 %v2174
        %vm2182 = vmor %vm2180, %vm2181
        %v2183 = vsel %vm2182, %v2174, %v2179
        %s2184 = vtos %v2183
        %v2185 = vstv %s2160
        %v2186 = vsub.f32 %v2120, %v2185
        %v2187 = vsub.f32 %v2121, %v2185
        %v2188 = vsub.f32 %v2122, %v2185
        %v2189 = vsub.f32 %v2123, %v2185
        %v2190 = vstv %s2184
        %v2191 = vmul.f32 %v2186, %v2190
        %v2192 = vmul.f32 %v2187, %v2190
        %v2193 = vmul.f32 %v2188, %v2190
        %v2194 = vmul.f32 %v2189, %v2190
        %v2195 = vmax.f32 %v2191, 0.0
        %v2196 = vmax.f32 %v2192, 0.0
        %v2197 = vmax.f32 %v2193, 0.0
        %v2198 = vmax.f32 %v2194, 0.0
        %2199 = vst [vmem:[%s274] sm:$0xff] %v2195
        %2200 = vst [vmem:[%s274 + $0x8] sm:$0xff] %v2196
        %2201 = vst [vmem:[%s274 + $0x10] sm:$0xff] %v2197
        %2202 = vst [vmem:[%s274 + $0x18] sm:$0xff] %v2198
        %s2203 = sand.u32 %s146, 1
        %s2204 = scalar_lea.sflag [#allocation4], %s2203
        %s2205 = sand.u32 %s146, 1
        %s2206 = smul.addr %s2205, 32
        %s2207 = scalar_lea.vmem [#allocation7], %s2206
        // Predicated region
        $region49: #{tpu_custom_call.1} parent=39 // pred_check
          %p2208 = pneg %p156
        $region50: #{tpu_custom_call.1} parent=39 // pred_check_branch
          %2210 = sbr.rel (%p2208) target = $region52
        $region51: #{tpu_custom_call.1} parent=39 // pred_region
          %2212 = vsyncadd %s2204, 0
          %s2213 = smul.addr %s23, 4
          %s2214 = smul.addr %s2213, 8
          %s2215 = scalar_lea.hbm %s5, %s2214
          %s2216 = sshll.u32 %s2207, 4
          %s2217 = int_to_ptr.vmem [resolvable:$true] %s2216
          %s2218 = sshll.u32 %s2215, 4
          %s2219 = int_to_ptr.hbm [resolvable:$true] %s2218
          %2224 = dma.vmem_to_hbm [thread:$0]  %s2217, 512, %s2219, %s2204, 128, 128, 8
        $region52: #{tpu_custom_call.1} parent=39 // pred_fallthru
          _
      $region40: #{tpu_custom_call.1} parent=5 // pred_fallthru
        _
      %p2225 = scmp.le.s32.totalorder 2, %s18
      // Predicated region
      $region53: #{tpu_custom_call.1} parent=5 // pred_check
        %p2226 = pneg %p2225
      $region54: #{tpu_custom_call.1} parent=5 // pred_check_branch
        %2228 = sbr.rel (%p2226) target = $region56
      $region55: #{tpu_custom_call.1} parent=5 // pred_region
        %s2229 = ssub.s32 %s18, 2
        // Predicated region
        $region57: #{tpu_custom_call.1} parent=55 // pred_check
          %p2230 = pneg %p162
        $region58: #{tpu_custom_call.1} parent=55 // pred_check_branch
          %2232 = sbr.rel (%p2230) target = $region60
        $region59: #{tpu_custom_call.1} parent=55 // pred_region
          %s2233 = sand.u32 %s147, 1
          %s2234 = scalar_lea.sflag [#allocation4], %s2233
          %s2235 = sand.u32 %s147, 1
          %s2236 = smul.addr %s2235, 32
          %s2237 = scalar_lea.vmem [#allocation7], %s2236
          %2239 = dma.done %s2234, 512
        $region60: #{tpu_custom_call.1} parent=55 // pred_fallthru
          _
      $region56: #{tpu_custom_call.1} parent=5 // pred_fallthru
        _
    $region6: #{tpu_custom_call.1} parent=1 // loop_footer
      %s22 = sadd.s32 1, %s18
    $region7: #{tpu_custom_call.1} parent=1 // loop_footer_branch
      %17 = sbr.rel target = $region3
    $region8: #{tpu_custom_call.1} parent=1 // loop_exit
      _
    %2240 = vsyncpa [#allocation3], 1
    %s2241 = scalar_lea.sflag [#allocation3], 1
    %2242 = vsyncpa %s2241, 1
    %2243 = vsyncpa [#allocation6], 1
    %2244 = vsyncpa [#allocation4], 1
    %s2245 = scalar_lea.sflag [#allocation4], 1
    %2246 = vsyncpa %s2245, 1

</llo_original>
